<compile_context>
chip_gen: v7x
topology: tpu7x:2x2x1
jax: 0.10.0
libtpu: 0.0.40
codegen_flags: <defaults>
</compile_context>

<pallas_src>
import functools
import math

import jax
import jax.numpy as jnp
from jax import lax
from jax.experimental import pallas as pl
from jax.experimental.pallas import tpu as pltpu


# ---------------------------------------------------------------------------
# Chip-aware VMEM budget / tile selection
# ---------------------------------------------------------------------------
def _vmem_budget_bytes():
    """~75% of this chip's physical VMEM (headroom for compiler scratch);
    conservative v7x-sized fallback if the query is unavailable."""
    try:
        return int(pltpu.get_tpu_info().vmem_capacity_bytes * 0.75)
    except Exception:
        return 48 * 1024 * 1024


def _pick_tile(D, two_d, mxu_bytes=2):
    """Largest lane-aligned (multiple-of-128) N-tile dividing D whose
    double-buffered W1 (2D, tn) + W2 (tn, D) blocks fit half the VMEM budget
    (rest is for the resident x / h / out and compiler scratch). Small or
    non-128-multiple D falls back to a single full-D tile (correct, just
    lane-padded)."""
    if D % 128 != 0:
        return D
    budget = _vmem_budget_bytes() // 2
    t = min(D, 1024)
    t -= t % 128
    while t >= 128:
        if D % t == 0 and 2 * mxu_bytes * t * (two_d + D) <= budget:
            return t
        t -= 128
    return 128


# ---------------------------------------------------------------------------
# Fused kernel: conv + adaptive max pool + BN + ReLU + Linear + ReLU + Linear
# ---------------------------------------------------------------------------
def _conv_mapping_kernel(x_ref, wc_ref, bc_ref, g_ref, bt_ref,
                         w1_ref, b1_ref, w2_ref, b2_ref,
                         out_ref, h_ref,
                         *, K, pad, pool_out, eps, mxu_dtype):
    """Grid: (D // tn,) over output-N tiles of Linear(2D, D) (== K tiles of
    Linear(D, D)). Stage 1 (conv/pool/BN/ReLU) runs once at grid step 0 and
    parks the (B, 2D) activation (bf16) in VMEM scratch; every step then
    streams one contiguous (2D, tn) block of W1 + the matching (tn, D) block
    of W2 and accumulates straight into the resident output block."""
    j = pl.program_id(0)

    # ---------------- stage 1: conv -> adaptive max pool -> BN -> ReLU ------
    @pl.when(j == 0)
    def _():
        x = x_ref[...].astype(mxu_dtype)                    # (B, L, C_in) NLC
        B, L, c_in = x.shape
        c_out = wc_ref.shape[-1]
        P = pool_out
        seg = L // P

        # Pad along L once (taps are built in VMEM; no wrapper-side jnp.pad).
        if pad > 0:
            zpad = jnp.zeros((B, pad, c_in), mxu_dtype)
            xp = jnp.concatenate([zpad, x, zpad], axis=1)   # (B, L+2*pad, C_in)
        else:
            xp = x

        # Conv1d(C_in -> C_out, k=K, pad=pad) as K accumulated whole-batch
        # (B*L, C_in) x (C_in, C_out) MXU matmuls: bf16 operands, f32 acc.
        # Avoids materializing the lane-sparse (B*L, K*C_in) im2col slab.
        y = None
        for k in range(K):                                   # K=3, unrolled
            tap = xp[:, k:k + L, :].reshape(B * L, c_in)
            yk = jnp.dot(tap, wc_ref[k], preferred_element_type=jnp.float32)
            y = yk if y is None else y + yk                  # (B*L, C_out) f32

        # AdaptiveMaxPool1d(P) with L % P == 0: one reshape + one max reduce.
        # Conv bias added AFTER the max (max is invariant to a per-channel
        # constant) -> identical result, L/P x less elementwise work.
        pooled = jnp.max(y.reshape(B, P, seg, c_out), axis=2) + bc_ref[...]

        # Lane-dense flatten in pool-major feature order (feature = p*C_out+co).
        # gamma/beta and W1's input rows were permuted to this order in
        # prepare_params, so the math equals PyTorch's channel-major rearrange.
        v = pooled.reshape(B, P * c_out)

        # BatchNorm1d (training mode: biased full-batch stats) + ReLU, in f32;
        # only the store to the scratch is cast to the MXU dtype.
        mean = jnp.mean(v, axis=0, keepdims=True)
        var = jnp.mean((v - mean) ** 2, axis=0, keepdims=True)
        h = g_ref[...] * (v - mean) * lax.rsqrt(var + eps) + bt_ref[...]
        h_ref[...] = jnp.maximum(h, 0.0).astype(mxu_dtype)

    # ---------------- stage 2: tiled Linear(2D,D) -> ReLU -> Linear(D,D) ----
    # Output-N tile j of Linear1 feeds rows tile j of Linear2's contraction.
    h1 = jnp.dot(h_ref[...], w1_ref[...],
                 preferred_element_type=jnp.float32) + b1_ref[...]    # (B, tn)
    h1 = jnp.maximum(h1, 0.0)
    part = jnp.dot(h1.astype(mxu_dtype), w2_ref[...],
                   preferred_element_type=jnp.float32)                # (B, D)

    @pl.when(j == 0)
    def _():
        out_ref[...] = jnp.zeros_like(out_ref)               # resident f32 block
    out_ref[...] += part

    @pl.when(j == pl.num_programs(0) - 1)
    def _():
        out_ref[...] += b2_ref[...]


# ---------------------------------------------------------------------------
# One-time parameter layout prep (keep OUTSIDE the per-call path)
# ---------------------------------------------------------------------------
def prepare_params(params, image_embed_dim, mxu_dtype=jnp.bfloat16, n_tile=None):
    """  * conv weight  -> per-tap matrices (K, C_in, C_out), MXU dtype
         * Linear weights pre-transposed to (fan_in, fan_out), MXU dtype;
           W1 additionally pre-blocked to (n_tiles, 2D, tn) so each grid
           step's block is a contiguous HBM region.
         * BN gamma/beta and W1's input rows re-ordered from PyTorch's
           channel-major flatten (feature = co*P + p) to the kernel's
           pool-major flatten (feature = p*C_out + co). Numerically identical;
           lets the kernel emit the pooled (B, 2D) slab with no transpose."""
    D = image_embed_dim
    c_out, c_in, K = params["conv_w"].shape
    two_d = 2 * D
    assert two_d % c_out == 0
    P = two_d // c_out

    tn = int(n_tile) if n_tile is not None else _pick_tile(D, two_d)
    assert D % tn == 0
    assert tn == D or tn % 128 == 0, "tn must be lane-aligned (or the full D)"
    n_tiles = D // tn

    def permute_features(g):               # (2D,) channel-major -> pool-major
        return jnp.transpose(g.reshape(c_out, P)).reshape(two_d)

    w1_t = jnp.transpose(params["lin1_w"])                            # (2D, D)
    w1_p = jnp.transpose(w1_t.reshape(c_out, P, D), (1, 0, 2)).reshape(two_d, D)
    # Pre-block the output dim: block j is contiguous in HBM.
    w1_blk = jnp.transpose(w1_p.reshape(two_d, n_tiles, tn), (1, 0, 2))

    return dict(
        tn=tn,
        conv_w=jnp.transpose(params["conv_w"], (2, 1, 0)).astype(mxu_dtype),  # (K, C_in, C_out)
        conv_b_row=params["conv_b"].reshape(1, c_out).astype(jnp.float32),
        bn_gamma_row=permute_features(params["bn_gamma"]).reshape(1, two_d)
                      .astype(jnp.float32),
        bn_beta_row=permute_features(params["bn_beta"]).reshape(1, two_d)
                      .astype(jnp.float32),
        w1_blocks=w1_blk.astype(mxu_dtype),                  # (n_tiles, 2D, tn)
        b1_row=params["lin1_b"].reshape(1, D).astype(jnp.float32),
        w2=jnp.transpose(params["lin2_w"]).astype(mxu_dtype),          # (D, D)
        b2_row=params["lin2_b"].reshape(1, D).astype(jnp.float32),
    )


# ---------------------------------------------------------------------------
# Full ConvMapping forward (single fused pallas_call)
# ---------------------------------------------------------------------------
def conv_mapping_forward(x_list, kparams, image_embed_dim):
    """x_list mirrors the PyTorch API: x[0] is unused, x[1:] are (B, C_i, L)."""
    # glue == torch.cat(x[1:], 1), presented channel-last (NLC).
    x_blc = jnp.concatenate([jnp.moveaxis(xi, 1, -1) for xi in x_list[1:]],
                            axis=-1)                                  # (B, L, C_in)
    B, L, c_in = x_blc.shape
    K, _, c_out = kparams["conv_w"].shape
    pad = (K - 1) // 2
    D = image_embed_dim
    two_d = 2 * D
    assert two_d % c_out == 0
    P = two_d // c_out
    assert L % P == 0, "TODO(synk): general AdaptiveMaxPool1d bins for L % P != 0"

    tn = int(kparams["tn"])
    n_tiles, blk_two_d, blk_tn = kparams["w1_blocks"].shape
    assert (blk_two_d, blk_tn) == (two_d, tn) and n_tiles * tn == D
    mxu_dtype = kparams["w1_blocks"].dtype

    kernel = functools.partial(
        _conv_mapping_kernel, K=K, pad=pad, pool_out=P, eps=1e-5,
        mxu_dtype=mxu_dtype)
    vmem_limit = _vmem_budget_bytes()

    def call(single_buffer_consts):
        def const_spec(shape, imap):
            # Constant-index blocks never re-fetch across j; the second
            # pipeline buffer is pure VMEM waste.
            if single_buffer_consts:
                return pl.BlockSpec(shape, imap, pipeline_mode=pl.Buffered(1))
            return pl.BlockSpec(shape, imap)

        in_specs = [
            const_spec((B, L, c_in), lambda j: (0, 0, 0)),     # x (resident)
            const_spec((K, c_in, c_out), lambda j: (0, 0, 0)), # conv taps
            const_spec((1, c_out), lambda j: (0, 0)),          # conv bias
            const_spec((1, two_d), lambda j: (0, 0)),          # bn gamma (permuted)
            const_spec((1, two_d), lambda j: (0, 0)),          # bn beta  (permuted)
            pl.BlockSpec((None, two_d, tn), lambda j: (j, 0, 0)),  # W1 block j (contiguous)
            pl.BlockSpec((1, tn), lambda j: (0, j)),           # b1 N-tile
            pl.BlockSpec((tn, D), lambda j: (j, 0)),           # W2 K-tile (contiguous rows)
            const_spec((1, D), lambda j: (0, 0)),              # b2
        ]
        return pl.pallas_call(
            kernel,
            out_shape=jax.ShapeDtypeStruct((B, D), jnp.float32),
            grid=(n_tiles,),
            in_specs=in_specs,
            out_specs=pl.BlockSpec((B, D), lambda j: (0, 0)),  # resident accumulator
            scratch_shapes=[
                pltpu.VMEM((B, two_d), mxu_dtype),             # h = ReLU(BN(v)), bf16
            ],
            compiler_params=pltpu.CompilerParams(
                dimension_semantics=("arbitrary",),            # sequential accumulation
                vmem_limit_bytes=vmem_limit,
            ),
        )(
            x_blc,
            kparams["conv_w"], kparams["conv_b_row"],
            kparams["bn_gamma_row"], kparams["bn_beta_row"],
            kparams["w1_blocks"], kparams["b1_row"],
            kparams["w2"], kparams["b2_row"],
        )

    try:
        return call(True)
    except Exception:
        # Fallback: pipeline_mode / pl.Buffered unsupported in this jax build.
        return call(False)


# ---------------------------------------------------------------------------
# Synthetic parameters (PyTorch-convention shapes / default-like init)
# ---------------------------------------------------------------------------
def init_params(key, image_embed_dim):
    D = image_embed_dim
    c_in, c_out, K = 5, 64, 3
    ks = jax.random.split(key, 8)

    def u(k, shape, fan_in):
        bound = 1.0 / math.sqrt(fan_in)
        return jax.random.uniform(k, shape, jnp.float32, -bound, bound)

    return dict(
        conv_w=u(ks[0], (c_out, c_in, K), c_in * K),
        conv_b=u(ks[1], (c_out,), c_in * K),
        # Randomized (instead of PyTorch's ones/zeros defaults) so the
        # permuted-feature path is actually exercised by the check below.
        bn_gamma=1.0 + 0.1 * jax.random.normal(ks[6], (2 * D,), jnp.float32),
        bn_beta=0.1 * jax.random.normal(ks[7], (2 * D,), jnp.float32),
        lin1_w=u(ks[2], (D, 2 * D), 2 * D),
        lin1_b=u(ks[3], (D,), 2 * D),
        lin2_w=u(ks[4], (D, D), D),
        lin2_b=u(ks[5], (D,), D),
    )


if __name__ == "__main__":
    D = 64            # image_embed_dim (small synthetic size); P = 2D/64 = 2
    B, L = 8, 16      # batch, conv sequence length
    key = jax.random.PRNGKey(0)
    kp, kx = jax.random.split(key)
    params = init_params(kp, D)
    kparams = prepare_params(params, D)            # one-time layout prep

    xk = jax.random.split(kx, 6)
    # x[0] is unused by this forward (only x[1:] are concatenated); kept to mirror the API.
    x_list = [jax.random.normal(xk[0], (B, D), jnp.float32)] + [
        jax.random.normal(xk[i + 1], (B, 1, L), jnp.float32) for i in range(5)
    ]

    out = jax.block_until_ready(conv_mapping_forward(x_list, kparams, D))
    assert out.shape == (B, D)

    # ---------------- pure-JAX references --------------------------------
    def reference(round_to_bf16):
        r = ((lambda a: a.astype(jnp.bfloat16).astype(jnp.float32))
             if round_to_bf16 else (lambda a: a))
        concat = jnp.concatenate(x_list[1:], axis=1)                  # (B, 5, L)
        c_out = params["conv_w"].shape[0]
        y = lax.conv_general_dilated(
            r(concat), r(params["conv_w"]), window_strides=(1,),
            padding=((1, 1),), dimension_numbers=("NCH", "OIH", "NCH"),
        ) + params["conv_b"][None, :, None]
        P = 2 * D // c_out
        pooled = y.reshape(B, c_out, P, L // P).max(-1)
        v = pooled.reshape(B, c_out * P)
        mean = v.mean(0, keepdims=True)
        var = ((v - mean) ** 2).mean(0, keepdims=True)
        h = (params["bn_gamma"][None] * (v - mean) * lax.rsqrt(var + 1e-5)
             + params["bn_beta"][None])
        h = jnp.maximum(h, 0.0)
        h1 = jnp.maximum(jnp.dot(r(h), r(params["lin1_w"].T))
                         + params["lin1_b"][None], 0.0)
        return jnp.dot(r(h1), r(params["lin2_w"].T)) + params["lin2_b"][None]

    # Strict: same bf16 operand rounding as the kernel's MXU path (f32 accumulate).
    ref_bf16 = reference(True)
    # Loose sanity: pure-f32 PyTorch semantics (bf16 MXU operands are the only deviation).
    ref_f32 = reference(False)

    assert jnp.allclose(out, ref_bf16, atol=2e-3, rtol=2e-3), \
        float(jnp.abs(out - ref_bf16).max())
    assert jnp.allclose(out, ref_f32, atol=5e-2, rtol=5e-2), \
        float(jnp.abs(out - ref_f32).max())
    print("KERNEL_OK")
</pallas_src>

<mosaic_0001>
module attributes {stable_mosaic.version = 11 : i64} {
  func.func @_conv_mapping_kernel(%arg0: i32, %arg1: memref<8x16x5xf32, #tpu.memory_space<vmem>>, %arg2: memref<3x5x64xbf16, #tpu.memory_space<vmem>>, %arg3: memref<1x64xf32, #tpu.memory_space<vmem>>, %arg4: memref<1x128xf32, #tpu.memory_space<vmem>>, %arg5: memref<1x128xf32, #tpu.memory_space<vmem>>, %arg6: memref<1x128x64xbf16, #tpu.memory_space<vmem>>, %arg7: memref<1x64xf32, #tpu.memory_space<vmem>>, %arg8: memref<64x64xbf16, #tpu.memory_space<vmem>>, %arg9: memref<1x64xf32, #tpu.memory_space<vmem>>, %arg10: memref<8x64xf32, #tpu.memory_space<vmem>>, %arg11: memref<8x128xbf16, #tpu.memory_space<vmem>>) attributes {dimension_semantics = [#tpu.dimension_semantics<arbitrary>], iteration_bounds = array<i64: 1>, scalar_prefetch = 0 : i64, scratch_operands = 1 : i64, tpu.core_type = #tpu.core_type<tc>, window_params = [{pipeline_mode = #tpu.pipeline_mode<synchronous>, transform_indices = @transform_0, window_bounds = array<i64: 8, 16, 5>}, {pipeline_mode = #tpu.pipeline_mode<synchronous>, transform_indices = @transform_1, window_bounds = array<i64: 3, 5, 64>}, {pipeline_mode = #tpu.pipeline_mode<synchronous>, transform_indices = @transform_2, window_bounds = array<i64: 1, 64>}, {pipeline_mode = #tpu.pipeline_mode<synchronous>, transform_indices = @transform_3, window_bounds = array<i64: 1, 128>}, {pipeline_mode = #tpu.pipeline_mode<synchronous>, transform_indices = @transform_4, window_bounds = array<i64: 1, 128>}, {transform_indices = @transform_5, window_bounds = array<i64: 1, 128, 64>}, {transform_indices = @transform_6, window_bounds = array<i64: 1, 64>}, {transform_indices = @transform_7, window_bounds = array<i64: 64, 64>}, {pipeline_mode = #tpu.pipeline_mode<synchronous>, transform_indices = @transform_8, window_bounds = array<i64: 1, 64>}, {pipeline_mode = #tpu.pipeline_mode<synchronous>, transform_indices = @transform_9, window_bounds = array<i64: 8, 64>}]} {
    %c0_i32 = arith.constant 0 : i32
    %0 = arith.cmpi eq, %arg0, %c0_i32 : i32
    %1 = arith.extui %0 : i1 to i32
    %c0_i32_0 = arith.constant 0 : i32
    %2 = arith.cmpi ne, %1, %c0_i32_0 : i32
    scf.if %2 {
      %c0_19 = arith.constant 0 : index
      %c0_20 = arith.constant 0 : index
      %c0_21 = arith.constant 0 : index
      %24 = vector.load %arg1[%c0_19, %c0_20, %c0_21] : memref<8x16x5xf32, #tpu.memory_space<vmem>>, vector<8x16x5xf32>
      %25 = arith.truncf %24 : vector<8x16x5xf32> to vector<8x16x5xbf16>
      %cst_22 = arith.constant 0.000000e+00 : bf16
      %26 = vector.broadcast %cst_22 : bf16 to vector<8x1x5xbf16>
      %27 = tpu.concatenate %26, %25, %26 in 1 : vector<8x1x5xbf16>, vector<8x16x5xbf16>, vector<8x1x5xbf16> -> vector<8x18x5xbf16>
      %28 = vector.extract_strided_slice %27 {offsets = [0, 0, 0], sizes = [8, 16, 5], strides = [1, 1, 1]} : vector<8x18x5xbf16> to vector<8x16x5xbf16>
      %29 = vector.shape_cast %28 : vector<8x16x5xbf16> to vector<128x5xbf16>
      %c0_23 = arith.constant 0 : index
      %c0_24 = arith.constant 0 : index
      %c0_25 = arith.constant 0 : index
      %30 = vector.load %arg2[%c0_23, %c0_24, %c0_25] : memref<3x5x64xbf16, #tpu.memory_space<vmem>>, vector<1x5x64xbf16>
      %31 = vector.shape_cast %30 : vector<1x5x64xbf16> to vector<5x64xbf16>
      %cst_26 = arith.constant dense<0.000000e+00> : vector<128x64xf32>
      %32 = tpu.matmul %29, %31, %cst_26 {dimension_numbers = #tpu.dot_dimension_numbers<[1], [0], [0], [1], [0, 0, 1, 1], [], []>} : vector<128x5xbf16>, vector<5x64xbf16>, vector<128x64xf32> -> vector<128x64xf32>
      %33 = vector.extract_strided_slice %27 {offsets = [0, 1, 0], sizes = [8, 16, 5], strides = [1, 1, 1]} : vector<8x18x5xbf16> to vector<8x16x5xbf16>
      %34 = vector.shape_cast %33 : vector<8x16x5xbf16> to vector<128x5xbf16>
      %c1 = arith.constant 1 : index
      %c0_27 = arith.constant 0 : index
      %c0_28 = arith.constant 0 : index
      %35 = vector.load %arg2[%c1, %c0_27, %c0_28] : memref<3x5x64xbf16, #tpu.memory_space<vmem>>, vector<1x5x64xbf16>
      %36 = vector.shape_cast %35 : vector<1x5x64xbf16> to vector<5x64xbf16>
      %cst_29 = arith.constant dense<0.000000e+00> : vector<128x64xf32>
      %37 = tpu.matmul %34, %36, %cst_29 {dimension_numbers = #tpu.dot_dimension_numbers<[1], [0], [0], [1], [0, 0, 1, 1], [], []>} : vector<128x5xbf16>, vector<5x64xbf16>, vector<128x64xf32> -> vector<128x64xf32>
      %38 = arith.addf %32, %37 : vector<128x64xf32>
      %39 = vector.extract_strided_slice %27 {offsets = [0, 2, 0], sizes = [8, 16, 5], strides = [1, 1, 1]} : vector<8x18x5xbf16> to vector<8x16x5xbf16>
      %40 = vector.shape_cast %39 : vector<8x16x5xbf16> to vector<128x5xbf16>
      %c2 = arith.constant 2 : index
      %c0_30 = arith.constant 0 : index
      %c0_31 = arith.constant 0 : index
      %41 = vector.load %arg2[%c2, %c0_30, %c0_31] : memref<3x5x64xbf16, #tpu.memory_space<vmem>>, vector<1x5x64xbf16>
      %42 = vector.shape_cast %41 : vector<1x5x64xbf16> to vector<5x64xbf16>
      %cst_32 = arith.constant dense<0.000000e+00> : vector<128x64xf32>
      %43 = tpu.matmul %40, %42, %cst_32 {dimension_numbers = #tpu.dot_dimension_numbers<[1], [0], [0], [1], [0, 0, 1, 1], [], []>} : vector<128x5xbf16>, vector<5x64xbf16>, vector<128x64xf32> -> vector<128x64xf32>
      %44 = arith.addf %38, %43 : vector<128x64xf32>
      %45 = vector.shape_cast %44 : vector<128x64xf32> to vector<8x2x8x64xf32>
      %cst_33 = arith.constant dense<0xFF800000> : vector<8x2x64xf32>
      %46 = vector.multi_reduction <maximumf>, %45, %cst_33 [2] : vector<8x2x8x64xf32> to vector<8x2x64xf32>
      %c0_34 = arith.constant 0 : index
      %c0_35 = arith.constant 0 : index
      %47 = vector.load %arg3[%c0_34, %c0_35] : memref<1x64xf32, #tpu.memory_space<vmem>>, vector<1x64xf32>
      %48 = vector.shape_cast %47 : vector<1x64xf32> to vector<1x1x64xf32>
      %49 = vector.broadcast %48 : vector<1x1x64xf32> to vector<8x2x64xf32>
      %50 = arith.addf %46, %49 : vector<8x2x64xf32>
      %51 = vector.shape_cast %50 : vector<8x2x64xf32> to vector<8x128xf32>
      %cst_36 = arith.constant dense<0.000000e+00> : vector<128xf32>
      %52 = vector.multi_reduction <add>, %51, %cst_36 [0] : vector<8x128xf32> to vector<128xf32>
      %53 = vector.shape_cast %52 : vector<128xf32> to vector<1x128xf32>
      %cst_37 = arith.constant 8.000000e+00 : f32
      %54 = vector.broadcast %cst_37 : f32 to vector<1x128xf32>
      %55 = arith.divf %53, %54 : vector<1x128xf32>
      %56 = vector.broadcast %55 : vector<1x128xf32> to vector<8x128xf32>
      %57 = arith.subf %51, %56 : vector<8x128xf32>
      %58 = arith.mulf %57, %57 : vector<8x128xf32>
      %cst_38 = arith.constant dense<0.000000e+00> : vector<128xf32>
      %59 = vector.multi_reduction <add>, %58, %cst_38 [0] : vector<8x128xf32> to vector<128xf32>
      %60 = vector.shape_cast %59 : vector<128xf32> to vector<1x128xf32>
      %cst_39 = arith.constant 8.000000e+00 : f32
      %61 = vector.broadcast %cst_39 : f32 to vector<1x128xf32>
      %62 = arith.divf %60, %61 : vector<1x128xf32>
      %c0_40 = arith.constant 0 : index
      %c0_41 = arith.constant 0 : index
      %63 = vector.load %arg4[%c0_40, %c0_41] : memref<1x128xf32, #tpu.memory_space<vmem>>, vector<1x128xf32>
      %64 = vector.broadcast %55 : vector<1x128xf32> to vector<8x128xf32>
      %65 = arith.subf %51, %64 : vector<8x128xf32>
      %66 = vector.broadcast %63 : vector<1x128xf32> to vector<8x128xf32>
      %67 = arith.mulf %66, %65 : vector<8x128xf32>
      %cst_42 = arith.constant 9.99999974E-6 : f32
      %68 = vector.broadcast %cst_42 : f32 to vector<1x128xf32>
      %69 = arith.addf %62, %68 : vector<1x128xf32>
      %70 = math.rsqrt %69 : vector<1x128xf32>
      %71 = vector.broadcast %70 : vector<1x128xf32> to vector<8x128xf32>
      %72 = arith.mulf %67, %71 : vector<8x128xf32>
      %c0_43 = arith.constant 0 : index
      %c0_44 = arith.constant 0 : index
      %73 = vector.load %arg5[%c0_43, %c0_44] : memref<1x128xf32, #tpu.memory_space<vmem>>, vector<1x128xf32>
      %74 = vector.broadcast %73 : vector<1x128xf32> to vector<8x128xf32>
      %75 = arith.addf %72, %74 : vector<8x128xf32>
      %cst_45 = arith.constant 0.000000e+00 : f32
      %76 = vector.broadcast %cst_45 : f32 to vector<8x128xf32>
      %77 = arith.maximumf %75, %76 : vector<8x128xf32>
      %78 = arith.truncf %77 : vector<8x128xf32> to vector<8x128xbf16>
      %c0_46 = arith.constant 0 : index
      %c0_47 = arith.constant 0 : index
      %79 = vector.load %arg11[%c0_46, %c0_47] : memref<8x128xbf16, #tpu.memory_space<vmem>>, vector<8x128xbf16>
      tpu.vector_store %arg11[%c0_46, %c0_47], %78 {strides = array<i32>} : memref<8x128xbf16, #tpu.memory_space<vmem>>, vector<8x128xbf16>,
    } else {
    }
    %c0 = arith.constant 0 : index
    %c0_1 = arith.constant 0 : index
    %3 = vector.load %arg11[%c0, %c0_1] : memref<8x128xbf16, #tpu.memory_space<vmem>>, vector<8x128xbf16>
    %c0_2 = arith.constant 0 : index
    %c0_3 = arith.constant 0 : index
    %c0_4 = arith.constant 0 : index
    %4 = vector.load %arg6[%c0_2, %c0_3, %c0_4] : memref<1x128x64xbf16, #tpu.memory_space<vmem>>, vector<1x128x64xbf16>
    %5 = vector.shape_cast %4 : vector<1x128x64xbf16> to vector<128x64xbf16>
    %cst = arith.constant dense<0.000000e+00> : vector<8x64xf32>
    %6 = tpu.matmul %3, %5, %cst {dimension_numbers = #tpu.dot_dimension_numbers<[1], [0], [0], [1], [0, 0, 1, 1], [], []>} : vector<8x128xbf16>, vector<128x64xbf16>, vector<8x64xf32> -> vector<8x64xf32>
    %c0_5 = arith.constant 0 : index
    %c0_6 = arith.constant 0 : index
    %7 = vector.load %arg7[%c0_5, %c0_6] : memref<1x64xf32, #tpu.memory_space<vmem>>, vector<1x64xf32>
    %8 = vector.broadcast %7 : vector<1x64xf32> to vector<8x64xf32>
    %9 = arith.addf %6, %8 : vector<8x64xf32>
    %cst_7 = arith.constant 0.000000e+00 : f32
    %10 = vector.broadcast %cst_7 : f32 to vector<8x64xf32>
    %11 = arith.maximumf %9, %10 : vector<8x64xf32>
    %12 = arith.truncf %11 : vector<8x64xf32> to vector<8x64xbf16>
    %c0_8 = arith.constant 0 : index
    %c0_9 = arith.constant 0 : index
    %13 = vector.load %arg8[%c0_8, %c0_9] : memref<64x64xbf16, #tpu.memory_space<vmem>>, vector<64x64xbf16>
    %cst_10 = arith.constant dense<0.000000e+00> : vector<8x64xf32>
    %14 = tpu.matmul %12, %13, %cst_10 {dimension_numbers = #tpu.dot_dimension_numbers<[1], [0], [0], [1], [0, 0, 1, 1], [], []>} : vector<8x64xbf16>, vector<64x64xbf16>, vector<8x64xf32> -> vector<8x64xf32>
    %c0_i32_11 = arith.constant 0 : i32
    %15 = arith.cmpi eq, %arg0, %c0_i32_11 : i32
    %16 = arith.extui %15 : i1 to i32
    %c0_i32_12 = arith.constant 0 : i32
    %17 = arith.cmpi ne, %16, %c0_i32_12 : i32
    scf.if %17 {
      %cst_19 = arith.constant 0.000000e+00 : f32
      %24 = vector.broadcast %cst_19 : f32 to vector<8x64xf32>
      %c0_20 = arith.constant 0 : index
      %c0_21 = arith.constant 0 : index
      %25 = vector.load %arg10[%c0_20, %c0_21] : memref<8x64xf32, #tpu.memory_space<vmem>>, vector<8x64xf32>
      tpu.vector_store %arg10[%c0_20, %c0_21], %24 {strides = array<i32>} : memref<8x64xf32, #tpu.memory_space<vmem>>, vector<8x64xf32>,
    } else {
    }
    %c0_13 = arith.constant 0 : index
    %c0_14 = arith.constant 0 : index
    %18 = vector.load %arg10[%c0_13, %c0_14] : memref<8x64xf32, #tpu.memory_space<vmem>>, vector<8x64xf32>
    %19 = arith.addf %18, %14 : vector<8x64xf32>
    %c0_15 = arith.constant 0 : index
    %c0_16 = arith.constant 0 : index
    %20 = vector.load %arg10[%c0_15, %c0_16] : memref<8x64xf32, #tpu.memory_space<vmem>>, vector<8x64xf32>
    tpu.vector_store %arg10[%c0_15, %c0_16], %19 {strides = array<i32>} : memref<8x64xf32, #tpu.memory_space<vmem>>, vector<8x64xf32>,
    %c0_i32_17 = arith.constant 0 : i32
    %21 = arith.cmpi eq, %arg0, %c0_i32_17 : i32
    %22 = arith.extui %21 : i1 to i32
    %c0_i32_18 = arith.constant 0 : i32
    %23 = arith.cmpi ne, %22, %c0_i32_18 : i32
    scf.if %23 {
      %c0_19 = arith.constant 0 : index
      %c0_20 = arith.constant 0 : index
      %24 = vector.load %arg10[%c0_19, %c0_20] : memref<8x64xf32, #tpu.memory_space<vmem>>, vector<8x64xf32>
      %c0_21 = arith.constant 0 : index
      %c0_22 = arith.constant 0 : index
      %25 = vector.load %arg9[%c0_21, %c0_22] : memref<1x64xf32, #tpu.memory_space<vmem>>, vector<1x64xf32>
      %26 = vector.broadcast %25 : vector<1x64xf32> to vector<8x64xf32>
      %27 = arith.addf %24, %26 : vector<8x64xf32>
      %c0_23 = arith.constant 0 : index
      %c0_24 = arith.constant 0 : index
      %28 = vector.load %arg10[%c0_23, %c0_24] : memref<8x64xf32, #tpu.memory_space<vmem>>, vector<8x64xf32>
      tpu.vector_store %arg10[%c0_23, %c0_24], %27 {strides = array<i32>} : memref<8x64xf32, #tpu.memory_space<vmem>>, vector<8x64xf32>,
    } else {
    }
    return
  }
  func.func @transform_0(%arg0: i32) -> (i32, i32, i32) {
    %c0_i32 = arith.constant 0 : i32
    %c0_i32_0 = arith.constant 0 : i32
    %c0_i32_1 = arith.constant 0 : i32
    %c0_i32_2 = arith.constant 0 : i32
    return %c0_i32, %c0_i32_0, %c0_i32_1 : i32, i32, i32
  }
  func.func @transform_1(%arg0: i32) -> (i32, i32, i32) {
    %c0_i32 = arith.constant 0 : i32
    %c0_i32_0 = arith.constant 0 : i32
    %c0_i32_1 = arith.constant 0 : i32
    %c0_i32_2 = arith.constant 0 : i32
    return %c0_i32, %c0_i32_0, %c0_i32_1 : i32, i32, i32
  }
  func.func @transform_2(%arg0: i32) -> (i32, i32) {
    %c0_i32 = arith.constant 0 : i32
    %c0_i32_0 = arith.constant 0 : i32
    %c0_i32_1 = arith.constant 0 : i32
    return %c0_i32, %c0_i32_0 : i32, i32
  }
  func.func @transform_3(%arg0: i32) -> (i32, i32) {
    %c0_i32 = arith.constant 0 : i32
    %c0_i32_0 = arith.constant 0 : i32
    %c0_i32_1 = arith.constant 0 : i32
    return %c0_i32, %c0_i32_0 : i32, i32
  }
  func.func @transform_4(%arg0: i32) -> (i32, i32) {
    %c0_i32 = arith.constant 0 : i32
    %c0_i32_0 = arith.constant 0 : i32
    %c0_i32_1 = arith.constant 0 : i32
    return %c0_i32, %c0_i32_0 : i32, i32
  }
  func.func @transform_5(%arg0: i32) -> (i32, i32, i32) {
    %c0_i32 = arith.constant 0 : i32
    %c0_i32_0 = arith.constant 0 : i32
    %c0_i32_1 = arith.constant 0 : i32
    return %arg0, %c0_i32, %c0_i32_0 : i32, i32, i32
  }
  func.func @transform_6(%arg0: i32) -> (i32, i32) {
    %c0_i32 = arith.constant 0 : i32
    %c0_i32_0 = arith.constant 0 : i32
    return %c0_i32, %arg0 : i32, i32
  }
  func.func @transform_7(%arg0: i32) -> (i32, i32) {
    %c0_i32 = arith.constant 0 : i32
    %c0_i32_0 = arith.constant 0 : i32
    return %arg0, %c0_i32 : i32, i32
  }
  func.func @transform_8(%arg0: i32) -> (i32, i32) {
    %c0_i32 = arith.constant 0 : i32
    %c0_i32_0 = arith.constant 0 : i32
    %c0_i32_1 = arith.constant 0 : i32
    return %c0_i32, %c0_i32_0 : i32, i32
  }
  func.func @transform_9(%arg0: i32) -> (i32, i32) {
    %c0_i32 = arith.constant 0 : i32
    %c0_i32_0 = arith.constant 0 : i32
    %c0_i32_1 = arith.constant 0 : i32
    return %c0_i32, %c0_i32_0 : i32, i32
  }
}

module attributes {stable_mosaic.version = 11 : i64} {
  func.func @_conv_mapping_kernel(%arg0: i32, %arg1: memref<8x16x5xf32, #tpu.memory_space<vmem>>, %arg2: memref<3x5x64xbf16, #tpu.memory_space<vmem>>, %arg3: memref<1x64xf32, #tpu.memory_space<vmem>>, %arg4: memref<1x128xf32, #tpu.memory_space<vmem>>, %arg5: memref<1x128xf32, #tpu.memory_space<vmem>>, %arg6: memref<1x128x64xbf16, #tpu.memory_space<vmem>>, %arg7: memref<1x64xf32, #tpu.memory_space<vmem>>, %arg8: memref<64x64xbf16, #tpu.memory_space<vmem>>, %arg9: memref<1x64xf32, #tpu.memory_space<vmem>>, %arg10: memref<8x64xf32, #tpu.memory_space<vmem>>, %arg11: memref<8x128xbf16, #tpu.memory_space<vmem>>) attributes {dimension_semantics = [#tpu.dimension_semantics<arbitrary>], iteration_bounds = array<i64: 1>, scalar_prefetch = 0 : i64, scratch_operands = 1 : i64, tpu.core_type = #tpu.core_type<tc>, window_params = [{pipeline_mode = #tpu.pipeline_mode<synchronous>, transform_indices = @transform_0, window_bounds = array<i64: 8, 16, 5>}, {pipeline_mode = #tpu.pipeline_mode<synchronous>, transform_indices = @transform_1, window_bounds = array<i64: 3, 5, 64>}, {pipeline_mode = #tpu.pipeline_mode<synchronous>, transform_indices = @transform_2, window_bounds = array<i64: 1, 64>}, {pipeline_mode = #tpu.pipeline_mode<synchronous>, transform_indices = @transform_3, window_bounds = array<i64: 1, 128>}, {pipeline_mode = #tpu.pipeline_mode<synchronous>, transform_indices = @transform_4, window_bounds = array<i64: 1, 128>}, {transform_indices = @transform_5, window_bounds = array<i64: 1, 128, 64>}, {transform_indices = @transform_6, window_bounds = array<i64: 1, 64>}, {transform_indices = @transform_7, window_bounds = array<i64: 64, 64>}, {pipeline_mode = #tpu.pipeline_mode<synchronous>, transform_indices = @transform_8, window_bounds = array<i64: 1, 64>}, {pipeline_mode = #tpu.pipeline_mode<synchronous>, transform_indices = @transform_9, window_bounds = array<i64: 8, 64>}]} {
    %c0_i32 = arith.constant 0 : i32
    %0 = arith.cmpi eq, %arg0, %c0_i32 : i32
    %1 = arith.extui %0 : i1 to i32
    %c0_i32_0 = arith.constant 0 : i32
    %2 = arith.cmpi ne, %1, %c0_i32_0 : i32
    scf.if %2 {
      %c0_19 = arith.constant 0 : index
      %c0_20 = arith.constant 0 : index
      %c0_21 = arith.constant 0 : index
      %24 = vector.load %arg1[%c0_19, %c0_20, %c0_21] : memref<8x16x5xf32, #tpu.memory_space<vmem>>, vector<8x16x5xf32>
      %25 = arith.truncf %24 : vector<8x16x5xf32> to vector<8x16x5xbf16>
      %cst_22 = arith.constant 0.000000e+00 : bf16
      %26 = vector.broadcast %cst_22 : bf16 to vector<8x1x5xbf16>
      %27 = tpu.concatenate %26, %25, %26 in 1 : vector<8x1x5xbf16>, vector<8x16x5xbf16>, vector<8x1x5xbf16> -> vector<8x18x5xbf16>
      %28 = vector.extract_strided_slice %27 {offsets = [0, 0, 0], sizes = [8, 16, 5], strides = [1, 1, 1]} : vector<8x18x5xbf16> to vector<8x16x5xbf16>
      %29 = vector.shape_cast %28 : vector<8x16x5xbf16> to vector<128x5xbf16>
      %c0_23 = arith.constant 0 : index
      %c0_24 = arith.constant 0 : index
      %c0_25 = arith.constant 0 : index
      %30 = vector.load %arg2[%c0_23, %c0_24, %c0_25] : memref<3x5x64xbf16, #tpu.memory_space<vmem>>, vector<1x5x64xbf16>
      %31 = vector.shape_cast %30 : vector<1x5x64xbf16> to vector<5x64xbf16>
      %cst_26 = arith.constant dense<0.000000e+00> : vector<128x64xf32>
      %32 = tpu.matmul %29, %31, %cst_26 {dimension_numbers = #tpu.dot_dimension_numbers<[1], [0], [0], [1], [0, 0, 1, 1], [], []>} : vector<128x5xbf16>, vector<5x64xbf16>, vector<128x64xf32> -> vector<128x64xf32>
      %33 = vector.extract_strided_slice %27 {offsets = [0, 1, 0], sizes = [8, 16, 5], strides = [1, 1, 1]} : vector<8x18x5xbf16> to vector<8x16x5xbf16>
      %34 = vector.shape_cast %33 : vector<8x16x5xbf16> to vector<128x5xbf16>
      %c1 = arith.constant 1 : index
      %c0_27 = arith.constant 0 : index
      %c0_28 = arith.constant 0 : index
      %35 = vector.load %arg2[%c1, %c0_27, %c0_28] : memref<3x5x64xbf16, #tpu.memory_space<vmem>>, vector<1x5x64xbf16>
      %36 = vector.shape_cast %35 : vector<1x5x64xbf16> to vector<5x64xbf16>
      %cst_29 = arith.constant dense<0.000000e+00> : vector<128x64xf32>
      %37 = tpu.matmul %34, %36, %cst_29 {dimension_numbers = #tpu.dot_dimension_numbers<[1], [0], [0], [1], [0, 0, 1, 1], [], []>} : vector<128x5xbf16>, vector<5x64xbf16>, vector<128x64xf32> -> vector<128x64xf32>
      %38 = arith.addf %32, %37 : vector<128x64xf32>
      %39 = vector.extract_strided_slice %27 {offsets = [0, 2, 0], sizes = [8, 16, 5], strides = [1, 1, 1]} : vector<8x18x5xbf16> to vector<8x16x5xbf16>
      %40 = vector.shape_cast %39 : vector<8x16x5xbf16> to vector<128x5xbf16>
      %c2 = arith.constant 2 : index
      %c0_30 = arith.constant 0 : index
      %c0_31 = arith.constant 0 : index
      %41 = vector.load %arg2[%c2, %c0_30, %c0_31] : memref<3x5x64xbf16, #tpu.memory_space<vmem>>, vector<1x5x64xbf16>
      %42 = vector.shape_cast %41 : vector<1x5x64xbf16> to vector<5x64xbf16>
      %cst_32 = arith.constant dense<0.000000e+00> : vector<128x64xf32>
      %43 = tpu.matmul %40, %42, %cst_32 {dimension_numbers = #tpu.dot_dimension_numbers<[1], [0], [0], [1], [0, 0, 1, 1], [], []>} : vector<128x5xbf16>, vector<5x64xbf16>, vector<128x64xf32> -> vector<128x64xf32>
      %44 = arith.addf %38, %43 : vector<128x64xf32>
      %45 = vector.shape_cast %44 : vector<128x64xf32> to vector<8x2x8x64xf32>
      %cst_33 = arith.constant dense<0xFF800000> : vector<8x2x64xf32>
      %46 = vector.multi_reduction <maximumf>, %45, %cst_33 [2] : vector<8x2x8x64xf32> to vector<8x2x64xf32>
      %c0_34 = arith.constant 0 : index
      %c0_35 = arith.constant 0 : index
      %47 = vector.load %arg3[%c0_34, %c0_35] : memref<1x64xf32, #tpu.memory_space<vmem>>, vector<1x64xf32>
      %48 = vector.shape_cast %47 : vector<1x64xf32> to vector<1x1x64xf32>
      %49 = vector.broadcast %48 : vector<1x1x64xf32> to vector<8x2x64xf32>
      %50 = arith.addf %46, %49 : vector<8x2x64xf32>
      %51 = vector.shape_cast %50 : vector<8x2x64xf32> to vector<8x128xf32>
      %cst_36 = arith.constant dense<0.000000e+00> : vector<128xf32>
      %52 = vector.multi_reduction <add>, %51, %cst_36 [0] : vector<8x128xf32> to vector<128xf32>
      %53 = vector.shape_cast %52 : vector<128xf32> to vector<1x128xf32>
      %cst_37 = arith.constant 8.000000e+00 : f32
      %54 = vector.broadcast %cst_37 : f32 to vector<1x128xf32>
      %55 = arith.divf %53, %54 : vector<1x128xf32>
      %56 = vector.broadcast %55 : vector<1x128xf32> to vector<8x128xf32>
      %57 = arith.subf %51, %56 : vector<8x128xf32>
      %58 = arith.mulf %57, %57 : vector<8x128xf32>
      %cst_38 = arith.constant dense<0.000000e+00> : vector<128xf32>
      %59 = vector.multi_reduction <add>, %58, %cst_38 [0] : vector<8x128xf32> to vector<128xf32>
      %60 = vector.shape_cast %59 : vector<128xf32> to vector<1x128xf32>
      %cst_39 = arith.constant 8.000000e+00 : f32
      %61 = vector.broadcast %cst_39 : f32 to vector<1x128xf32>
      %62 = arith.divf %60, %61 : vector<1x128xf32>
      %c0_40 = arith.constant 0 : index
      %c0_41 = arith.constant 0 : index
      %63 = vector.load %arg4[%c0_40, %c0_41] : memref<1x128xf32, #tpu.memory_space<vmem>>, vector<1x128xf32>
      %64 = vector.broadcast %55 : vector<1x128xf32> to vector<8x128xf32>
      %65 = arith.subf %51, %64 : vector<8x128xf32>
      %66 = vector.broadcast %63 : vector<1x128xf32> to vector<8x128xf32>
      %67 = arith.mulf %66, %65 : vector<8x128xf32>
      %cst_42 = arith.constant 9.99999974E-6 : f32
      %68 = vector.broadcast %cst_42 : f32 to vector<1x128xf32>
      %69 = arith.addf %62, %68 : vector<1x128xf32>
      %70 = math.rsqrt %69 : vector<1x128xf32>
      %71 = vector.broadcast %70 : vector<1x128xf32> to vector<8x128xf32>
      %72 = arith.mulf %67, %71 : vector<8x128xf32>
      %c0_43 = arith.constant 0 : index
      %c0_44 = arith.constant 0 : index
      %73 = vector.load %arg5[%c0_43, %c0_44] : memref<1x128xf32, #tpu.memory_space<vmem>>, vector<1x128xf32>
      %74 = vector.broadcast %73 : vector<1x128xf32> to vector<8x128xf32>
      %75 = arith.addf %72, %74 : vector<8x128xf32>
      %cst_45 = arith.constant 0.000000e+00 : f32
      %76 = vector.broadcast %cst_45 : f32 to vector<8x128xf32>
      %77 = arith.maximumf %75, %76 : vector<8x128xf32>
      %78 = arith.truncf %77 : vector<8x128xf32> to vector<8x128xbf16>
      %c0_46 = arith.constant 0 : index
      %c0_47 = arith.constant 0 : index
      %79 = vector.load %arg11[%c0_46, %c0_47] : memref<8x128xbf16, #tpu.memory_space<vmem>>, vector<8x128xbf16>
      tpu.vector_store %arg11[%c0_46, %c0_47], %78 {strides = array<i32>} : memref<8x128xbf16, #tpu.memory_space<vmem>>, vector<8x128xbf16>,
    } else {
    }
    %c0 = arith.constant 0 : index
    %c0_1 = arith.constant 0 : index
    %3 = vector.load %arg11[%c0, %c0_1] : memref<8x128xbf16, #tpu.memory_space<vmem>>, vector<8x128xbf16>
    %c0_2 = arith.constant 0 : index
    %c0_3 = arith.constant 0 : index
    %c0_4 = arith.constant 0 : index
    %4 = vector.load %arg6[%c0_2, %c0_3, %c0_4] : memref<1x128x64xbf16, #tpu.memory_space<vmem>>, vector<1x128x64xbf16>
    %5 = vector.shape_cast %4 : vector<1x128x64xbf16> to vector<128x64xbf16>
    %cst = arith.constant dense<0.000000e+00> : vector<8x64xf32>
    %6 = tpu.matmul %3, %5, %cst {dimension_numbers = #tpu.dot_dimension_numbers<[1], [0], [0], [1], [0, 0, 1, 1], [], []>} : vector<8x128xbf16>, vector<128x64xbf16>, vector<8x64xf32> -> vector<8x64xf32>
    %c0_5 = arith.constant 0 : index
    %c0_6 = arith.constant 0 : index
    %7 = vector.load %arg7[%c0_5, %c0_6] : memref<1x64xf32, #tpu.memory_space<vmem>>, vector<1x64xf32>
    %8 = vector.broadcast %7 : vector<1x64xf32> to vector<8x64xf32>
    %9 = arith.addf %6, %8 : vector<8x64xf32>
    %cst_7 = arith.constant 0.000000e+00 : f32
    %10 = vector.broadcast %cst_7 : f32 to vector<8x64xf32>
    %11 = arith.maximumf %9, %10 : vector<8x64xf32>
    %12 = arith.truncf %11 : vector<8x64xf32> to vector<8x64xbf16>
    %c0_8 = arith.constant 0 : index
    %c0_9 = arith.constant 0 : index
    %13 = vector.load %arg8[%c0_8, %c0_9] : memref<64x64xbf16, #tpu.memory_space<vmem>>, vector<64x64xbf16>
    %cst_10 = arith.constant dense<0.000000e+00> : vector<8x64xf32>
    %14 = tpu.matmul %12, %13, %cst_10 {dimension_numbers = #tpu.dot_dimension_numbers<[1], [0], [0], [1], [0, 0, 1, 1], [], []>} : vector<8x64xbf16>, vector<64x64xbf16>, vector<8x64xf32> -> vector<8x64xf32>
    %c0_i32_11 = arith.constant 0 : i32
    %15 = arith.cmpi eq, %arg0, %c0_i32_11 : i32
    %16 = arith.extui %15 : i1 to i32
    %c0_i32_12 = arith.constant 0 : i32
    %17 = arith.cmpi ne, %16, %c0_i32_12 : i32
    scf.if %17 {
      %cst_19 = arith.constant 0.000000e+00 : f32
      %24 = vector.broadcast %cst_19 : f32 to vector<8x64xf32>
      %c0_20 = arith.constant 0 : index
      %c0_21 = arith.constant 0 : index
      %25 = vector.load %arg10[%c0_20, %c0_21] : memref<8x64xf32, #tpu.memory_space<vmem>>, vector<8x64xf32>
      tpu.vector_store %arg10[%c0_20, %c0_21], %24 {strides = array<i32>} : memref<8x64xf32, #tpu.memory_space<vmem>>, vector<8x64xf32>,
    } else {
    }
    %c0_13 = arith.constant 0 : index
    %c0_14 = arith.constant 0 : index
    %18 = vector.load %arg10[%c0_13, %c0_14] : memref<8x64xf32, #tpu.memory_space<vmem>>, vector<8x64xf32>
    %19 = arith.addf %18, %14 : vector<8x64xf32>
    %c0_15 = arith.constant 0 : index
    %c0_16 = arith.constant 0 : index
    %20 = vector.load %arg10[%c0_15, %c0_16] : memref<8x64xf32, #tpu.memory_space<vmem>>, vector<8x64xf32>
    tpu.vector_store %arg10[%c0_15, %c0_16], %19 {strides = array<i32>} : memref<8x64xf32, #tpu.memory_space<vmem>>, vector<8x64xf32>,
    %c0_i32_17 = arith.constant 0 : i32
    %21 = arith.cmpi eq, %arg0, %c0_i32_17 : i32
    %22 = arith.extui %21 : i1 to i32
    %c0_i32_18 = arith.constant 0 : i32
    %23 = arith.cmpi ne, %22, %c0_i32_18 : i32
    scf.if %23 {
      %c0_19 = arith.constant 0 : index
      %c0_20 = arith.constant 0 : index
      %24 = vector.load %arg10[%c0_19, %c0_20] : memref<8x64xf32, #tpu.memory_space<vmem>>, vector<8x64xf32>
      %c0_21 = arith.constant 0 : index
      %c0_22 = arith.constant 0 : index
      %25 = vector.load %arg9[%c0_21, %c0_22] : memref<1x64xf32, #tpu.memory_space<vmem>>, vector<1x64xf32>
      %26 = vector.broadcast %25 : vector<1x64xf32> to vector<8x64xf32>
      %27 = arith.addf %24, %26 : vector<8x64xf32>
      %c0_23 = arith.constant 0 : index
      %c0_24 = arith.constant 0 : index
      %28 = vector.load %arg10[%c0_23, %c0_24] : memref<8x64xf32, #tpu.memory_space<vmem>>, vector<8x64xf32>
      tpu.vector_store %arg10[%c0_23, %c0_24], %27 {strides = array<i32>} : memref<8x64xf32, #tpu.memory_space<vmem>>, vector<8x64xf32>,
    } else {
    }
    return
  }
  func.func @transform_0(%arg0: i32) -> (i32, i32, i32) {
    %c0_i32 = arith.constant 0 : i32
    %c0_i32_0 = arith.constant 0 : i32
    %c0_i32_1 = arith.constant 0 : i32
    %c0_i32_2 = arith.constant 0 : i32
    return %c0_i32, %c0_i32_0, %c0_i32_1 : i32, i32, i32
  }
  func.func @transform_1(%arg0: i32) -> (i32, i32, i32) {
    %c0_i32 = arith.constant 0 : i32
    %c0_i32_0 = arith.constant 0 : i32
    %c0_i32_1 = arith.constant 0 : i32
    %c0_i32_2 = arith.constant 0 : i32
    return %c0_i32, %c0_i32_0, %c0_i32_1 : i32, i32, i32
  }
  func.func @transform_2(%arg0: i32) -> (i32, i32) {
    %c0_i32 = arith.constant 0 : i32
    %c0_i32_0 = arith.constant 0 : i32
    %c0_i32_1 = arith.constant 0 : i32
    return %c0_i32, %c0_i32_0 : i32, i32
  }
  func.func @transform_3(%arg0: i32) -> (i32, i32) {
    %c0_i32 = arith.constant 0 : i32
    %c0_i32_0 = arith.constant 0 : i32
    %c0_i32_1 = arith.constant 0 : i32
    return %c0_i32, %c0_i32_0 : i32, i32
  }
  func.func @transform_4(%arg0: i32) -> (i32, i32) {
    %c0_i32 = arith.constant 0 : i32
    %c0_i32_0 = arith.constant 0 : i32
    %c0_i32_1 = arith.constant 0 : i32
    return %c0_i32, %c0_i32_0 : i32, i32
  }
  func.func @transform_5(%arg0: i32) -> (i32, i32, i32) {
    %c0_i32 = arith.constant 0 : i32
    %c0_i32_0 = arith.constant 0 : i32
    %c0_i32_1 = arith.constant 0 : i32
    return %arg0, %c0_i32, %c0_i32_0 : i32, i32, i32
  }
  func.func @transform_6(%arg0: i32) -> (i32, i32) {
    %c0_i32 = arith.constant 0 : i32
    %c0_i32_0 = arith.constant 0 : i32
    return %c0_i32, %arg0 : i32, i32
  }
  func.func @transform_7(%arg0: i32) -> (i32, i32) {
    %c0_i32 = arith.constant 0 : i32
    %c0_i32_0 = arith.constant 0 : i32
    return %arg0, %c0_i32 : i32, i32
  }
  func.func @transform_8(%arg0: i32) -> (i32, i32) {
    %c0_i32 = arith.constant 0 : i32
    %c0_i32_0 = arith.constant 0 : i32
    %c0_i32_1 = arith.constant 0 : i32
    return %c0_i32, %c0_i32_0 : i32, i32
  }
  func.func @transform_9(%arg0: i32) -> (i32, i32) {
    %c0_i32 = arith.constant 0 : i32
    %c0_i32_0 = arith.constant 0 : i32
    %c0_i32_1 = arith.constant 0 : i32
    return %c0_i32, %c0_i32_0 : i32, i32
  }
}

</mosaic_0001>

<llo_original>
// kernel: tpu_custom_call.1
$region0: #{tpu_custom_call.1}
  #allocation0 [shape = 'u32[]', space=smem, size = 0x4, offset = 0x4, fixed_abs, tag = 'smem constant byte address 0x4 - core index']
  #allocation1 [shape = 'u32[144,128]{1,0:T(1,128)}', space=vmem, size = 0x12000, scoped, tag = 'internal scratch']
  #allocation2 [shape = 'bf16[8,128]{1,0:T(8,128)(2,1)}', space=vmem, size = 0x800, scoped, tag = 'scratch operand']
  %s0 = inlined_call_operand.vmem [shape: f32[8,16,5], index: 0, kind: input, shape index: {}]
  %s1 = inlined_call_operand.vmem [shape: bf16[3,5,64], index: 1, kind: input, shape index: {}]
  %s2 = inlined_call_operand.vmem [shape: f32[1,64], index: 2, kind: input, shape index: {}]
  %s3 = inlined_call_operand.vmem [shape: f32[1,128], index: 3, kind: input, shape index: {}]
  %s4 = inlined_call_operand.vmem [shape: f32[1,128], index: 4, kind: input, shape index: {}]
  %s5 = inlined_call_operand.vmem [shape: bf16[1,128,64], index: 5, kind: input, shape index: {}]
  %s6 = inlined_call_operand.vmem [shape: f32[1,64], index: 6, kind: input, shape index: {}]
  %s7 = inlined_call_operand.vmem [shape: bf16[64,64], index: 7, kind: input, shape index: {}]
  %s8 = inlined_call_operand.vmem [shape: f32[1,64], index: 8, kind: input, shape index: {}]
  %s9 = inlined_call_operand.hbm [shape: f32[8,64], index: 9, kind: output, shape index: {}]
  %s10 = sld [smem:[#allocation0]]
  $region58: #{tpu_custom_call.1} parent=0
    _
  %s12 = ssub.s32 1, %s10
  %s13 = scalar_select 0, %s12, %s10
  $region1: #{tpu_custom_call.1} parent=0
    #allocation3 [shape = 'u8[4096]{0}', space=vmem, size = 0x1000, scoped, tag = 'output window, operand 0, single buffered']
    #allocation4 [shape = 's32[1]{0}', space=sflag, size = 0x4, scoped, tag = 'scoped memory for tpu_custom_call.1']
    %14 = vsyncpa [#allocation4], 0
    // Predicated region
    $region2: #{tpu_custom_call.1} parent=1 // pred_check
      _
    $region3: #{tpu_custom_call.1} parent=1 // pred_check_branch
      %16 = sbr.rel (0) target = $region5
    $region4: #{tpu_custom_call.1} parent=1 // pred_region
      _
    $region5: #{tpu_custom_call.1} parent=1 // pred_fallthru
      _
    // Predicated region
    $region6: #{tpu_custom_call.1} parent=1 // pred_check
      _
    $region7: #{tpu_custom_call.1} parent=1 // pred_check_branch
      %18 = sbr.rel (0) target = $region9
    $region8: #{tpu_custom_call.1} parent=1 // pred_region
      _
    $region9: #{tpu_custom_call.1} parent=1 // pred_fallthru
      _
    // Predicated region
    $region10: #{tpu_custom_call.1} parent=1 // pred_check
      _
    $region11: #{tpu_custom_call.1} parent=1 // pred_check_branch
      %20 = sbr.rel (0) target = $region13
    $region12: #{tpu_custom_call.1} parent=1 // pred_region
      _
    $region13: #{tpu_custom_call.1} parent=1 // pred_fallthru
      _
    // Predicated region
    $region14: #{tpu_custom_call.1} parent=1 // pred_check
      _
    $region15: #{tpu_custom_call.1} parent=1 // pred_check_branch
      %22 = sbr.rel (0) target = $region17
    $region16: #{tpu_custom_call.1} parent=1 // pred_region
      _
    $region17: #{tpu_custom_call.1} parent=1 // pred_fallthru
      _
    // Predicated region
    $region18: #{tpu_custom_call.1} parent=1 // pred_check
      _
    $region19: #{tpu_custom_call.1} parent=1 // pred_check_branch
      %24 = sbr.rel (0) target = $region21
    $region20: #{tpu_custom_call.1} parent=1 // pred_region
      _
    $region21: #{tpu_custom_call.1} parent=1 // pred_fallthru
      _
    // Predicated region
    $region22: #{tpu_custom_call.1} parent=1 // pred_check
      _
    $region23: #{tpu_custom_call.1} parent=1 // pred_check_branch
      %26 = sbr.rel (0) target = $region25
    $region24: #{tpu_custom_call.1} parent=1 // pred_region
      _
    $region25: #{tpu_custom_call.1} parent=1 // pred_fallthru
      _
    // Predicated region
    $region26: #{tpu_custom_call.1} parent=1 // pred_check
      _
    $region27: #{tpu_custom_call.1} parent=1 // pred_check_branch
      %28 = sbr.rel (0) target = $region29
    $region28: #{tpu_custom_call.1} parent=1 // pred_region
      _
    $region29: #{tpu_custom_call.1} parent=1 // pred_fallthru
      _
    // Predicated region
    $region30: #{tpu_custom_call.1} parent=1 // pred_check
      _
    $region31: #{tpu_custom_call.1} parent=1 // pred_check_branch
      %30 = sbr.rel (0) target = $region33
    $region32: #{tpu_custom_call.1} parent=1 // pred_region
      _
    $region33: #{tpu_custom_call.1} parent=1 // pred_fallthru
      _
    // Predicated region
    $region34: #{tpu_custom_call.1} parent=1 // pred_check
      _
    $region35: #{tpu_custom_call.1} parent=1 // pred_check_branch
      %32 = sbr.rel (0) target = $region37
    $region36: #{tpu_custom_call.1} parent=1 // pred_region
      _
    $region37: #{tpu_custom_call.1} parent=1 // pred_fallthru
      _
    %p34 = scmp.eq.s32.totalorder 0, 0
    // Predicated region
    $region38: #{tpu_custom_call.1} parent=1 // pred_check
      %p35 = pneg %p34
    $region39: #{tpu_custom_call.1} parent=1 // pred_check_branch
      %37 = sbr.rel (%p35) target = $region41
    $region40: #{tpu_custom_call.1} parent=1 // pred_region
      %v38 = vld [vmem:[%s0] sm:$0xff]
      %v39 = vld [vmem:[%s0 + $0x8] sm:$0xff]
      %v40 = vld [vmem:[%s0 + $0x10] sm:$0xff]
      %v41 = vld [vmem:[%s0 + $0x18] sm:$0xff]
      %v42 = vld [vmem:[%s0 + $0x20] sm:$0xff]
      %v43 = vld [vmem:[%s0 + $0x28] sm:$0xff]
      %v44 = vld [vmem:[%s0 + $0x30] sm:$0xff]
      %v45 = vld [vmem:[%s0 + $0x38] sm:$0xff]
      %v46 = vld [vmem:[%s0 + $0x40] sm:$0xff]
      %v47 = vld [vmem:[%s0 + $0x48] sm:$0xff]
      %v48 = vld [vmem:[%s0 + $0x50] sm:$0xff]
      %v49 = vld [vmem:[%s0 + $0x58] sm:$0xff]
      %v50 = vld [vmem:[%s0 + $0x60] sm:$0xff]
      %v51 = vld [vmem:[%s0 + $0x68] sm:$0xff]
      %v52 = vld [vmem:[%s0 + $0x70] sm:$0xff]
      %v53 = vld [vmem:[%s0 + $0x78] sm:$0xff]
      %v54 = vpack.c.bf16 %v39, %v38
      %v55 = vpack.c.bf16 %v41, %v40
      %v56 = vpack.c.bf16 %v43, %v42
      %v57 = vpack.c.bf16 %v45, %v44
      %v58 = vpack.c.bf16 %v47, %v46
      %v59 = vpack.c.bf16 %v49, %v48
      %v60 = vpack.c.bf16 %v51, %v50
      %v61 = vpack.c.bf16 %v53, %v52
      %v63 = vshrl.u32 %v54, 16
      %v65 = vrot.slane %v63, 7
      %v66 = vshll.u32 %v54, 16
      %v68 = vor.u32 %v65, %v66
      %v70 = vshrl.u32 %v55, 16
      %v72 = vrot.slane %v70, 7
      %v73 = vshll.u32 %v55, 16
      %v75 = vor.u32 %v72, %v73
      %v77 = vshrl.u32 %v56, 16
      %v79 = vrot.slane %v77, 7
      %v80 = vshll.u32 %v56, 16
      %v82 = vor.u32 %v79, %v80
      %v84 = vshrl.u32 %v57, 16
      %v86 = vrot.slane %v84, 7
      %v87 = vshll.u32 %v57, 16
      %v89 = vor.u32 %v86, %v87
      %v91 = vshrl.u32 %v58, 16
      %v93 = vrot.slane %v91, 7
      %v94 = vshll.u32 %v58, 16
      %v96 = vor.u32 %v93, %v94
      %v98 = vshrl.u32 %v59, 16
      %v100 = vrot.slane %v98, 7
      %v101 = vshll.u32 %v59, 16
      %v103 = vor.u32 %v100, %v101
      %v105 = vshrl.u32 %v60, 16
      %v107 = vrot.slane %v105, 7
      %v108 = vshll.u32 %v60, 16
      %v110 = vor.u32 %v107, %v108
      %v112 = vshrl.u32 %v61, 16
      %v114 = vrot.slane %v112, 7
      %v115 = vshll.u32 %v61, 16
      %v117 = vor.u32 %v114, %v115
      %vm134 = vcmask 1040384
      %vm135 = vsmask.f32 256
      %vm136 = vmand %vm134, %vm135
      %v137 = vsel %vm136, 0, %v68
      %v138 = vsel %vm136, 0, %v75
      %v139 = vsel %vm136, 0, %v82
      %v140 = vsel %vm136, 0, %v89
      %v141 = vsel %vm136, 0, %v96
      %v142 = vsel %vm136, 0, %v103
      %v143 = vsel %vm136, 0, %v110
      %v144 = vsel %vm136, 0, %v117
      %v145 = vsel %vm136, %v65, 0
      %v146 = vsel %vm136, %v72, 0
      %v147 = vsel %vm136, %v79, 0
      %v148 = vsel %vm136, %v86, 0
      %v149 = vsel %vm136, %v93, 0
      %v150 = vsel %vm136, %v100, 0
      %v151 = vsel %vm136, %v107, 0
      %v152 = vsel %vm136, %v114, 0
      %v153 = vld [vmem:[%s1] sm:$0x7]
      %vm154 = vsmask.f32 7424
      %v156 = vshrl.u32 %v137, 16
      %v158 = vshll.u32 %v137, 16
      %v160 = vrot.slane %v158, 1
      %v161 = vor.u32 %v156, %v160
      %v163 = vshll.u32 %v145, 16
      %v165 = vrot.slane %v163, 1
      %v166 = vsel %vm154, %v161, %v165
      %v168 = vshrl.u32 %v138, 16
      %v170 = vshll.u32 %v138, 16
      %v172 = vrot.slane %v170, 1
      %v173 = vor.u32 %v168, %v172
      %v175 = vshll.u32 %v146, 16
      %v177 = vrot.slane %v175, 1
      %v178 = vsel %vm154, %v173, %v177
      %v180 = vshrl.u32 %v139, 16
      %v182 = vshll.u32 %v139, 16
      %v184 = vrot.slane %v182, 1
      %v185 = vor.u32 %v180, %v184
      %v187 = vshll.u32 %v147, 16
      %v189 = vrot.slane %v187, 1
      %v190 = vsel %vm154, %v185, %v189
      %v192 = vshrl.u32 %v140, 16
      %v194 = vshll.u32 %v140, 16
      %v196 = vrot.slane %v194, 1
      %v197 = vor.u32 %v192, %v196
      %v199 = vshll.u32 %v148, 16
      %v201 = vrot.slane %v199, 1
      %v202 = vsel %vm154, %v197, %v201
      %v204 = vshrl.u32 %v141, 16
      %v206 = vshll.u32 %v141, 16
      %v208 = vrot.slane %v206, 1
      %v209 = vor.u32 %v204, %v208
      %v211 = vshll.u32 %v149, 16
      %v213 = vrot.slane %v211, 1
      %v214 = vsel %vm154, %v209, %v213
      %v216 = vshrl.u32 %v142, 16
      %v218 = vshll.u32 %v142, 16
      %v220 = vrot.slane %v218, 1
      %v221 = vor.u32 %v216, %v220
      %v223 = vshll.u32 %v150, 16
      %v225 = vrot.slane %v223, 1
      %v226 = vsel %vm154, %v221, %v225
      %v228 = vshrl.u32 %v143, 16
      %v230 = vshll.u32 %v143, 16
      %v232 = vrot.slane %v230, 1
      %v233 = vor.u32 %v228, %v232
      %v235 = vshll.u32 %v151, 16
      %v237 = vrot.slane %v235, 1
      %v238 = vsel %vm154, %v233, %v237
      %v240 = vshrl.u32 %v144, 16
      %v242 = vshll.u32 %v144, 16
      %v244 = vrot.slane %v242, 1
      %v245 = vor.u32 %v240, %v244
      %v247 = vshll.u32 %v152, 16
      %v249 = vrot.slane %v247, 1
      %v250 = vsel %vm154, %v245, %v249
      %s251 = scalar_lea.vmem %s1, 4
      %v252 = vld [vmem:[%s251] sm:$0x7]
      %vm253 = vcmask 39936
      %v255 = vsel %vm253, %v166, 0
      %v258 = vsel %vm253, %v178, 0
      %v261 = vsel %vm253, %v190, 0
      %v264 = vsel %vm253, %v202, 0
      %v267 = vsel %vm253, %v214, 0
      %v270 = vsel %vm253, %v226, 0
      %v273 = vsel %vm253, %v238, 0
      %v276 = vsel %vm253, %v250, 0
      %vm278 = vcmask 1041408
      %vm279 = vcmask 1042432
      %v280 = vsel %vm278, 4294967295, 65535
      %v281 = vsel %vm279, %v280, 0
      %v283 = vand.u32 %v252, %v281
      %285 = vmatprep.subr.bf16.mxu0 0
      %286 = vmatpush1.bf16.msra.mxu0 %v283
      %287 = vmatprep.subr.bf16.mxu0 0
      %288 = vmatpush1.bf16.msra.mxu0 0
      %289 = vmatprep.subr.bf16.mxu0 0
      %290 = vmatpush1.bf16.msra.mxu0 0
      %291 = vmatprep.subr.bf16.mxu0 0
      %292 = vmatpush1.bf16.msra.mxu0 0
      %293 = vmatprep.subr.bf16.mxu0 0
      %294 = vmatpush1.bf16.msra.mxu0 0
      %295 = vmatprep.subr.bf16.mxu0 0
      %296 = vmatpush1.bf16.msra.mxu0 0
      %297 = vmatprep.subr.bf16.mxu0 0
      %298 = vmatpush1.bf16.msra.mxu0 0
      %299 = vmatprep.subr.bf16.mxu0 0
      %300 = vmatpush1.bf16.msra.mxu0 0
      %301 = vmatprep.subr.bf16.mxu0 0
      %302 = vmatpush1.bf16.msra.mxu0 0
      %303 = vmatprep.subr.bf16.mxu0 0
      %304 = vmatpush1.bf16.msra.mxu0 0
      %305 = vmatprep.subr.bf16.mxu0 0
      %306 = vmatpush1.bf16.msra.mxu0 0
      %307 = vmatprep.subr.bf16.mxu0 0
      %308 = vmatpush1.bf16.msra.mxu0 0
      %309 = vmatprep.subr.bf16.mxu0 0
      %310 = vmatpush1.bf16.msra.mxu0 0
      %311 = vmatprep.subr.bf16.mxu0 0
      %312 = vmatpush1.bf16.msra.mxu0 0
      %313 = vmatprep.subr.bf16.mxu0 0
      %314 = vmatpush1.bf16.msra.mxu0 0
      %315 = vmatprep.subr.bf16.mxu0 0
      %316 = vmatpush1.bf16.msra.mxu0 0
      %317 = vmatprep.mubr.bf16.mxu0 0
      %318 = vmatmul.mubr.bf16.gmra.mrb[0].mxu0 %v255
      %v319 = vpop.f32.mrb[0].mxu0
      %v320 = vadd.f32 0.0, %v319
      %v321 = vpop.f32.mrb[0].mxu0
      %v322 = vpop.f32.mrb[0].mxu0
      %v323 = vadd.f32 0.0, %v322
      %v324 = vpop.f32.mrb[0].mxu0
      %325 = vmatprep.mubr.bf16.mxu0 0
      %326 = vmatmul.mubr.bf16.gmra.mrb[0].mxu0 %v258
      %v327 = vpop.f32.mrb[0].mxu0
      %v328 = vadd.f32 0.0, %v327
      %v329 = vpop.f32.mrb[0].mxu0
      %v330 = vpop.f32.mrb[0].mxu0
      %v331 = vadd.f32 0.0, %v330
      %v332 = vpop.f32.mrb[0].mxu0
      %333 = vmatprep.mubr.bf16.mxu0 0
      %334 = vmatmul.mubr.bf16.gmra.mrb[0].mxu0 %v261
      %v335 = vpop.f32.mrb[0].mxu0
      %v336 = vadd.f32 0.0, %v335
      %v337 = vpop.f32.mrb[0].mxu0
      %v338 = vpop.f32.mrb[0].mxu0
      %v339 = vadd.f32 0.0, %v338
      %v340 = vpop.f32.mrb[0].mxu0
      %341 = vmatprep.mubr.bf16.mxu0 0
      %342 = vmatmul.mubr.bf16.gmra.mrb[0].mxu0 %v264
      %v343 = vpop.f32.mrb[0].mxu0
      %v344 = vadd.f32 0.0, %v343
      %v345 = vpop.f32.mrb[0].mxu0
      %v346 = vpop.f32.mrb[0].mxu0
      %v347 = vadd.f32 0.0, %v346
      %v348 = vpop.f32.mrb[0].mxu0
      %349 = vmatprep.mubr.bf16.mxu0 0
      %350 = vmatmul.mubr.bf16.gmra.mrb[0].mxu0 %v267
      %v351 = vpop.f32.mrb[0].mxu0
      %v352 = vadd.f32 0.0, %v351
      %v353 = vpop.f32.mrb[0].mxu0
      %v354 = vpop.f32.mrb[0].mxu0
      %v355 = vadd.f32 0.0, %v354
      %v356 = vpop.f32.mrb[0].mxu0
      %357 = vmatprep.mubr.bf16.mxu0 0
      %358 = vmatmul.mubr.bf16.gmra.mrb[0].mxu0 %v270
      %v359 = vpop.f32.mrb[0].mxu0
      %v360 = vadd.f32 0.0, %v359
      %v361 = vpop.f32.mrb[0].mxu0
      %v362 = vpop.f32.mrb[0].mxu0
      %v363 = vadd.f32 0.0, %v362
      %v364 = vpop.f32.mrb[0].mxu0
      %365 = vmatprep.mubr.bf16.mxu0 0
      %366 = vmatmul.mubr.bf16.gmra.mrb[0].mxu0 %v273
      %v367 = vpop.f32.mrb[0].mxu0
      %v368 = vadd.f32 0.0, %v367
      %v369 = vpop.f32.mrb[0].mxu0
      %v370 = vpop.f32.mrb[0].mxu0
      %v371 = vadd.f32 0.0, %v370
      %v372 = vpop.f32.mrb[0].mxu0
      %373 = vmatprep.mubr.bf16.mxu0 0
      %374 = vmatmul.mubr.bf16.gmra.mrb[0].mxu0 %v276
      %v375 = vpop.f32.mrb[0].mxu0
      %v376 = vadd.f32 0.0, %v375
      %v377 = vpop.f32.mrb[0].mxu0
      %v378 = vpop.f32.mrb[0].mxu0
      %v379 = vadd.f32 0.0, %v378
      %v380 = vpop.f32.mrb[0].mxu0
      %381 = vdwg.mxu0
      %v382 = vsel %vm253, %v137, 0
      %v384 = vsel %vm253, %v138, 0
      %v386 = vsel %vm253, %v139, 0
      %v388 = vsel %vm253, %v140, 0
      %v390 = vsel %vm253, %v141, 0
      %v392 = vsel %vm253, %v142, 0
      %v394 = vsel %vm253, %v143, 0
      %v396 = vsel %vm253, %v144, 0
      %v399 = vand.u32 %v153, %v281
      %401 = vmatprep.subr.bf16.mxu0 0
      %402 = vmatpush1.bf16.msra.mxu0 %v399
      %403 = vmatprep.subr.bf16.mxu0 0
      %404 = vmatpush1.bf16.msra.mxu0 0
      %405 = vmatprep.subr.bf16.mxu0 0
      %406 = vmatpush1.bf16.msra.mxu0 0
      %407 = vmatprep.subr.bf16.mxu0 0
      %408 = vmatpush1.bf16.msra.mxu0 0
      %409 = vmatprep.subr.bf16.mxu0 0
      %410 = vmatpush1.bf16.msra.mxu0 0
      %411 = vmatprep.subr.bf16.mxu0 0
      %412 = vmatpush1.bf16.msra.mxu0 0
      %413 = vmatprep.subr.bf16.mxu0 0
      %414 = vmatpush1.bf16.msra.mxu0 0
      %415 = vmatprep.subr.bf16.mxu0 0
      %416 = vmatpush1.bf16.msra.mxu0 0
      %417 = vmatprep.subr.bf16.mxu0 0
      %418 = vmatpush1.bf16.msra.mxu0 0
      %419 = vmatprep.subr.bf16.mxu0 0
      %420 = vmatpush1.bf16.msra.mxu0 0
      %421 = vmatprep.subr.bf16.mxu0 0
      %422 = vmatpush1.bf16.msra.mxu0 0
      %423 = vmatprep.subr.bf16.mxu0 0
      %424 = vmatpush1.bf16.msra.mxu0 0
      %425 = vmatprep.subr.bf16.mxu0 0
      %426 = vmatpush1.bf16.msra.mxu0 0
      %427 = vmatprep.subr.bf16.mxu0 0
      %428 = vmatpush1.bf16.msra.mxu0 0
      %429 = vmatprep.subr.bf16.mxu0 0
      %430 = vmatpush1.bf16.msra.mxu0 0
      %431 = vmatprep.subr.bf16.mxu0 0
      %432 = vmatpush1.bf16.msra.mxu0 0
      %433 = vmatprep.mubr.bf16.mxu0 0
      %434 = vmatmul.mubr.bf16.gmra.mrb[0].mxu0 %v382
      %v435 = vpop.f32.mrb[0].mxu0
      %v436 = vadd.f32 %v320, %v435
      %v437 = vpop.f32.mrb[0].mxu0
      %v438 = vpop.f32.mrb[0].mxu0
      %v439 = vadd.f32 %v323, %v438
      %v440 = vpop.f32.mrb[0].mxu0
      %441 = vmatprep.mubr.bf16.mxu0 0
      %442 = vmatmul.mubr.bf16.gmra.mrb[0].mxu0 %v384
      %v443 = vpop.f32.mrb[0].mxu0
      %v444 = vadd.f32 %v328, %v443
      %v445 = vpop.f32.mrb[0].mxu0
      %v446 = vpop.f32.mrb[0].mxu0
      %v447 = vadd.f32 %v331, %v446
      %v448 = vpop.f32.mrb[0].mxu0
      %449 = vmatprep.mubr.bf16.mxu0 0
      %450 = vmatmul.mubr.bf16.gmra.mrb[0].mxu0 %v386
      %v451 = vpop.f32.mrb[0].mxu0
      %v452 = vadd.f32 %v336, %v451
      %v453 = vpop.f32.mrb[0].mxu0
      %v454 = vpop.f32.mrb[0].mxu0
      %v455 = vadd.f32 %v339, %v454
      %v456 = vpop.f32.mrb[0].mxu0
      %457 = vmatprep.mubr.bf16.mxu0 0
      %458 = vmatmul.mubr.bf16.gmra.mrb[0].mxu0 %v388
      %v459 = vpop.f32.mrb[0].mxu0
      %v460 = vadd.f32 %v344, %v459
      %v461 = vpop.f32.mrb[0].mxu0
      %v462 = vpop.f32.mrb[0].mxu0
      %v463 = vadd.f32 %v347, %v462
      %v464 = vpop.f32.mrb[0].mxu0
      %465 = vmatprep.mubr.bf16.mxu0 0
      %466 = vmatmul.mubr.bf16.gmra.mrb[0].mxu0 %v390
      %v467 = vpop.f32.mrb[0].mxu0
      %v468 = vadd.f32 %v352, %v467
      %v469 = vpop.f32.mrb[0].mxu0
      %v470 = vpop.f32.mrb[0].mxu0
      %v471 = vadd.f32 %v355, %v470
      %v472 = vpop.f32.mrb[0].mxu0
      %473 = vmatprep.mubr.bf16.mxu0 0
      %474 = vmatmul.mubr.bf16.gmra.mrb[0].mxu0 %v392
      %v475 = vpop.f32.mrb[0].mxu0
      %v476 = vadd.f32 %v360, %v475
      %v477 = vpop.f32.mrb[0].mxu0
      %v478 = vpop.f32.mrb[0].mxu0
      %v479 = vadd.f32 %v363, %v478
      %v480 = vpop.f32.mrb[0].mxu0
      %481 = vmatprep.mubr.bf16.mxu0 0
      %482 = vmatmul.mubr.bf16.gmra.mrb[0].mxu0 %v394
      %v483 = vpop.f32.mrb[0].mxu0
      %v484 = vadd.f32 %v368, %v483
      %v485 = vpop.f32.mrb[0].mxu0
      %v486 = vpop.f32.mrb[0].mxu0
      %v487 = vadd.f32 %v371, %v486
      %v488 = vpop.f32.mrb[0].mxu0
      %489 = vmatprep.mubr.bf16.mxu0 0
      %490 = vmatmul.mubr.bf16.gmra.mrb[0].mxu0 %v396
      %v491 = vpop.f32.mrb[0].mxu0
      %v492 = vadd.f32 %v376, %v491
      %v493 = vpop.f32.mrb[0].mxu0
      %v494 = vpop.f32.mrb[0].mxu0
      %v495 = vadd.f32 %v379, %v494
      %v496 = vpop.f32.mrb[0].mxu0
      %497 = vdwg.mxu0
      %vm514 = vcmask 1046528
      %v515 = vrot.slane %v137, 1
      %v516 = vrot.slane %v145, 1
      %v517 = vsel %vm514, %v515, %v516
      %v518 = vrot.slane %v138, 1
      %v519 = vrot.slane %v146, 1
      %v520 = vsel %vm514, %v518, %v519
      %v521 = vrot.slane %v139, 1
      %v522 = vrot.slane %v147, 1
      %v523 = vsel %vm514, %v521, %v522
      %v524 = vrot.slane %v140, 1
      %v525 = vrot.slane %v148, 1
      %v526 = vsel %vm514, %v524, %v525
      %v527 = vrot.slane %v141, 1
      %v528 = vrot.slane %v149, 1
      %v529 = vsel %vm514, %v527, %v528
      %v530 = vrot.slane %v142, 1
      %v531 = vrot.slane %v150, 1
      %v532 = vsel %vm514, %v530, %v531
      %v533 = vrot.slane %v143, 1
      %v534 = vrot.slane %v151, 1
      %v535 = vsel %vm514, %v533, %v534
      %v536 = vrot.slane %v144, 1
      %v537 = vrot.slane %v152, 1
      %v538 = vsel %vm514, %v536, %v537
      %s539 = scalar_lea.vmem %s1, 8
      %v540 = vld [vmem:[%s539] sm:$0x7]
      %v542 = vsel %vm253, %v517, 0
      %v545 = vsel %vm253, %v520, 0
      %v548 = vsel %vm253, %v523, 0
      %v551 = vsel %vm253, %v526, 0
      %v554 = vsel %vm253, %v529, 0
      %v557 = vsel %vm253, %v532, 0
      %v560 = vsel %vm253, %v535, 0
      %v563 = vsel %vm253, %v538, 0
      %v566 = vand.u32 %v540, %v281
      %568 = vmatprep.subr.bf16.mxu0 0
      %569 = vmatpush1.bf16.msra.mxu0 %v566
      %570 = vmatprep.subr.bf16.mxu0 0
      %571 = vmatpush1.bf16.msra.mxu0 0
      %572 = vmatprep.subr.bf16.mxu0 0
      %573 = vmatpush1.bf16.msra.mxu0 0
      %574 = vmatprep.subr.bf16.mxu0 0
      %575 = vmatpush1.bf16.msra.mxu0 0
      %576 = vmatprep.subr.bf16.mxu0 0
      %577 = vmatpush1.bf16.msra.mxu0 0
      %578 = vmatprep.subr.bf16.mxu0 0
      %579 = vmatpush1.bf16.msra.mxu0 0
      %580 = vmatprep.subr.bf16.mxu0 0
      %581 = vmatpush1.bf16.msra.mxu0 0
      %582 = vmatprep.subr.bf16.mxu0 0
      %583 = vmatpush1.bf16.msra.mxu0 0
      %584 = vmatprep.subr.bf16.mxu0 0
      %585 = vmatpush1.bf16.msra.mxu0 0
      %586 = vmatprep.subr.bf16.mxu0 0
      %587 = vmatpush1.bf16.msra.mxu0 0
      %588 = vmatprep.subr.bf16.mxu0 0
      %589 = vmatpush1.bf16.msra.mxu0 0
      %590 = vmatprep.subr.bf16.mxu0 0
      %591 = vmatpush1.bf16.msra.mxu0 0
      %592 = vmatprep.subr.bf16.mxu0 0
      %593 = vmatpush1.bf16.msra.mxu0 0
      %594 = vmatprep.subr.bf16.mxu0 0
      %595 = vmatpush1.bf16.msra.mxu0 0
      %596 = vmatprep.subr.bf16.mxu0 0
      %597 = vmatpush1.bf16.msra.mxu0 0
      %598 = vmatprep.subr.bf16.mxu0 0
      %599 = vmatpush1.bf16.msra.mxu0 0
      %600 = vmatprep.mubr.bf16.mxu0 0
      %601 = vmatmul.mubr.bf16.gmra.mrb[0].mxu0 %v542
      %v602 = vpop.f32.mrb[0].mxu0
      %v603 = vadd.f32 0.0, %v602
      %v604 = vpop.f32.mrb[0].mxu0
      %v605 = vpop.f32.mrb[0].mxu0
      %v606 = vadd.f32 0.0, %v605
      %v607 = vpop.f32.mrb[0].mxu0
      %608 = vmatprep.mubr.bf16.mxu0 0
      %609 = vmatmul.mubr.bf16.gmra.mrb[0].mxu0 %v545
      %v610 = vpop.f32.mrb[0].mxu0
      %v611 = vadd.f32 0.0, %v610
      %v612 = vpop.f32.mrb[0].mxu0
      %v613 = vpop.f32.mrb[0].mxu0
      %v614 = vadd.f32 0.0, %v613
      %v615 = vpop.f32.mrb[0].mxu0
      %616 = vmatprep.mubr.bf16.mxu0 0
      %617 = vmatmul.mubr.bf16.gmra.mrb[0].mxu0 %v548
      %v618 = vpop.f32.mrb[0].mxu0
      %v619 = vadd.f32 0.0, %v618
      %v620 = vpop.f32.mrb[0].mxu0
      %v621 = vpop.f32.mrb[0].mxu0
      %v622 = vadd.f32 0.0, %v621
      %v623 = vpop.f32.mrb[0].mxu0
      %624 = vmatprep.mubr.bf16.mxu0 0
      %625 = vmatmul.mubr.bf16.gmra.mrb[0].mxu0 %v551
      %v626 = vpop.f32.mrb[0].mxu0
      %v627 = vadd.f32 0.0, %v626
      %v628 = vpop.f32.mrb[0].mxu0
      %v629 = vpop.f32.mrb[0].mxu0
      %v630 = vadd.f32 0.0, %v629
      %v631 = vpop.f32.mrb[0].mxu0
      %632 = vmatprep.mubr.bf16.mxu0 0
      %633 = vmatmul.mubr.bf16.gmra.mrb[0].mxu0 %v554
      %v634 = vpop.f32.mrb[0].mxu0
      %v635 = vadd.f32 0.0, %v634
      %v636 = vpop.f32.mrb[0].mxu0
      %v637 = vpop.f32.mrb[0].mxu0
      %v638 = vadd.f32 0.0, %v637
      %v639 = vpop.f32.mrb[0].mxu0
      %640 = vmatprep.mubr.bf16.mxu0 0
      %641 = vmatmul.mubr.bf16.gmra.mrb[0].mxu0 %v557
      %v642 = vpop.f32.mrb[0].mxu0
      %v643 = vadd.f32 0.0, %v642
      %v644 = vpop.f32.mrb[0].mxu0
      %v645 = vpop.f32.mrb[0].mxu0
      %v646 = vadd.f32 0.0, %v645
      %v647 = vpop.f32.mrb[0].mxu0
      %648 = vmatprep.mubr.bf16.mxu0 0
      %649 = vmatmul.mubr.bf16.gmra.mrb[0].mxu0 %v560
      %v650 = vpop.f32.mrb[0].mxu0
      %v651 = vadd.f32 0.0, %v650
      %v652 = vpop.f32.mrb[0].mxu0
      %v653 = vpop.f32.mrb[0].mxu0
      %v654 = vadd.f32 0.0, %v653
      %v655 = vpop.f32.mrb[0].mxu0
      %656 = vmatprep.mubr.bf16.mxu0 0
      %657 = vmatmul.mubr.bf16.gmra.mrb[0].mxu0 %v563
      %v658 = vpop.f32.mrb[0].mxu0
      %v659 = vadd.f32 0.0, %v658
      %v660 = vpop.f32.mrb[0].mxu0
      %v661 = vpop.f32.mrb[0].mxu0
      %v662 = vadd.f32 0.0, %v661
      %v663 = vpop.f32.mrb[0].mxu0
      %664 = vdwg.mxu0
      %v665 = vadd.f32 %v436, %v603
      %v666 = vadd.f32 %v439, %v606
      %v667 = vadd.f32 %v444, %v611
      %v668 = vadd.f32 %v447, %v614
      %v669 = vadd.f32 %v452, %v619
      %v670 = vadd.f32 %v455, %v622
      %v671 = vadd.f32 %v460, %v627
      %v672 = vadd.f32 %v463, %v630
      %v673 = vadd.f32 %v468, %v635
      %v674 = vadd.f32 %v471, %v638
      %v675 = vadd.f32 %v476, %v643
      %v676 = vadd.f32 %v479, %v646
      %v677 = vadd.f32 %v484, %v651
      %v678 = vadd.f32 %v487, %v654
      %v679 = vadd.f32 %v492, %v659
      %v680 = vadd.f32 %v495, %v662
      %vm681 = vcmask 523264
      %v682 = vsel %vm681, %v665, -inf
      %v683 = vrot.slane %v682, 4
      %v684 = vmax.f32 %v682, %v683
      %v685 = vrot.slane %v684, 2
      %v686 = vmax.f32 %v684, %v685
      %v687 = vrot.slane %v686, 1
      %v688 = vmax.f32 %v686, %v687
      %v689 = vsel %vm681, %v666, -inf
      %v690 = vrot.slane %v689, 4
      %v691 = vmax.f32 %v689, %v690
      %v692 = vrot.slane %v691, 2
      %v693 = vmax.f32 %v691, %v692
      %v694 = vrot.slane %v693, 1
      %v695 = vmax.f32 %v693, %v694
      %v696 = vsel %vm681, %v667, -inf
      %v697 = vrot.slane %v696, 4
      %v698 = vmax.f32 %v696, %v697
      %v699 = vrot.slane %v698, 2
      %v700 = vmax.f32 %v698, %v699
      %v701 = vrot.slane %v700, 1
      %v702 = vmax.f32 %v700, %v701
      %v703 = vsel %vm681, %v668, -inf
      %v704 = vrot.slane %v703, 4
      %v705 = vmax.f32 %v703, %v704
      %v706 = vrot.slane %v705, 2
      %v707 = vmax.f32 %v705, %v706
      %v708 = vrot.slane %v707, 1
      %v709 = vmax.f32 %v707, %v708
      %v710 = vsel %vm681, %v669, -inf
      %v711 = vrot.slane %v710, 4
      %v712 = vmax.f32 %v710, %v711
      %v713 = vrot.slane %v712, 2
      %v714 = vmax.f32 %v712, %v713
      %v715 = vrot.slane %v714, 1
      %v716 = vmax.f32 %v714, %v715
      %v717 = vsel %vm681, %v670, -inf
      %v718 = vrot.slane %v717, 4
      %v719 = vmax.f32 %v717, %v718
      %v720 = vrot.slane %v719, 2
      %v721 = vmax.f32 %v719, %v720
      %v722 = vrot.slane %v721, 1
      %v723 = vmax.f32 %v721, %v722
      %v724 = vsel %vm681, %v671, -inf
      %v725 = vrot.slane %v724, 4
      %v726 = vmax.f32 %v724, %v725
      %v727 = vrot.slane %v726, 2
      %v728 = vmax.f32 %v726, %v727
      %v729 = vrot.slane %v728, 1
      %v730 = vmax.f32 %v728, %v729
      %v731 = vsel %vm681, %v672, -inf
      %v732 = vrot.slane %v731, 4
      %v733 = vmax.f32 %v731, %v732
      %v734 = vrot.slane %v733, 2
      %v735 = vmax.f32 %v733, %v734
      %v736 = vrot.slane %v735, 1
      %v737 = vmax.f32 %v735, %v736
      %v738 = vsel %vm681, %v673, -inf
      %v739 = vrot.slane %v738, 4
      %v740 = vmax.f32 %v738, %v739
      %v741 = vrot.slane %v740, 2
      %v742 = vmax.f32 %v740, %v741
      %v743 = vrot.slane %v742, 1
      %v744 = vmax.f32 %v742, %v743
      %v745 = vsel %vm681, %v674, -inf
      %v746 = vrot.slane %v745, 4
      %v747 = vmax.f32 %v745, %v746
      %v748 = vrot.slane %v747, 2
      %v749 = vmax.f32 %v747, %v748
      %v750 = vrot.slane %v749, 1
      %v751 = vmax.f32 %v749, %v750
      %v752 = vsel %vm681, %v675, -inf
      %v753 = vrot.slane %v752, 4
      %v754 = vmax.f32 %v752, %v753
      %v755 = vrot.slane %v754, 2
      %v756 = vmax.f32 %v754, %v755
      %v757 = vrot.slane %v756, 1
      %v758 = vmax.f32 %v756, %v757
      %v759 = vsel %vm681, %v676, -inf
      %v760 = vrot.slane %v759, 4
      %v761 = vmax.f32 %v759, %v760
      %v762 = vrot.slane %v761, 2
      %v763 = vmax.f32 %v761, %v762
      %v764 = vrot.slane %v763, 1
      %v765 = vmax.f32 %v763, %v764
      %v766 = vsel %vm681, %v677, -inf
      %v767 = vrot.slane %v766, 4
      %v768 = vmax.f32 %v766, %v767
      %v769 = vrot.slane %v768, 2
      %v770 = vmax.f32 %v768, %v769
      %v771 = vrot.slane %v770, 1
      %v772 = vmax.f32 %v770, %v771
      %v773 = vsel %vm681, %v678, -inf
      %v774 = vrot.slane %v773, 4
      %v775 = vmax.f32 %v773, %v774
      %v776 = vrot.slane %v775, 2
      %v777 = vmax.f32 %v775, %v776
      %v778 = vrot.slane %v777, 1
      %v779 = vmax.f32 %v777, %v778
      %v780 = vsel %vm681, %v679, -inf
      %v781 = vrot.slane %v780, 4
      %v782 = vmax.f32 %v780, %v781
      %v783 = vrot.slane %v782, 2
      %v784 = vmax.f32 %v782, %v783
      %v785 = vrot.slane %v784, 1
      %v786 = vmax.f32 %v784, %v785
      %v787 = vsel %vm681, %v680, -inf
      %v788 = vrot.slane %v787, 4
      %v789 = vmax.f32 %v787, %v788
      %v790 = vrot.slane %v789, 2
      %v791 = vmax.f32 %v789, %v790
      %v792 = vrot.slane %v791, 1
      %v793 = vmax.f32 %v791, %v792
      %v794 = vld [vmem:[%s2] sm:$0x1]
      %v796 = vlaneseq
      %v797 = vshrl.u32 %v796, 7
      %v798 = vsub.s32 0, %v797
      %v799 = vrot.slane %v794, %v798
      %v801 = vadd.f32 %v688, %v799
      %v802 = vadd.f32 %v695, %v799
      %v803 = vadd.f32 %v702, %v799
      %v804 = vadd.f32 %v709, %v799
      %v805 = vadd.f32 %v716, %v799
      %v806 = vadd.f32 %v723, %v799
      %v807 = vadd.f32 %v730, %v799
      %v808 = vadd.f32 %v737, %v799
      %v809 = vadd.f32 %v744, %v799
      %v810 = vadd.f32 %v751, %v799
      %v811 = vadd.f32 %v758, %v799
      %v812 = vadd.f32 %v765, %v799
      %v813 = vadd.f32 %v772, %v799
      %v814 = vadd.f32 %v779, %v799
      %v815 = vadd.f32 %v786, %v799
      %v816 = vadd.f32 %v793, %v799
      %v833 = vrot.slane %v802, 7
      %vm834 = vcmask 1041409
      %v835 = vsel %vm834, %v833, %v801
      %v836 = vrot.slane %v804, 7
      %v837 = vsel %vm834, %v836, %v803
      %v838 = vrot.slane %v806, 7
      %v839 = vsel %vm834, %v838, %v805
      %v840 = vrot.slane %v808, 7
      %v841 = vsel %vm834, %v840, %v807
      %v842 = vrot.slane %v810, 7
      %v843 = vsel %vm834, %v842, %v809
      %v844 = vrot.slane %v812, 7
      %v845 = vsel %vm834, %v844, %v811
      %v846 = vrot.slane %v814, 7
      %v847 = vsel %vm834, %v846, %v813
      %v848 = vrot.slane %v816, 7
      %v849 = vsel %vm834, %v848, %v815
      %v858 = vcombine.low %v835, %v839
      %v860 = vunpack.c.l.s4 1983009808
      %v861 = vunpack.c.0.s8 %v860
      %v862 = vlaneseq
      %v863 = vshrl.u32 %v862, 7
      %v864 = vsub.s32 %v861, %v863
      %v865 = vrot.slane %v858, %v864
      %v866 = vcombine.low %v837, %v841
      %v868 = vunpack.c.l.s4 1983009808
      %v869 = vunpack.c.0.s8 %v868
      %v870 = vlaneseq
      %v871 = vshrl.u32 %v870, 7
      %v872 = vsub.s32 %v869, %v871
      %v873 = vrot.slane %v866, %v872
      %v874 = vcombine.low %v843, %v847
      %v876 = vunpack.c.l.s4 1983009808
      %v877 = vunpack.c.0.s8 %v876
      %v878 = vlaneseq
      %v879 = vshrl.u32 %v878, 7
      %v880 = vsub.s32 %v877, %v879
      %v881 = vrot.slane %v874, %v880
      %v882 = vcombine.low %v845, %v849
      %v884 = vunpack.c.l.s4 1983009808
      %v885 = vunpack.c.0.s8 %v884
      %v886 = vlaneseq
      %v887 = vshrl.u32 %v886, 7
      %v888 = vsub.s32 %v885, %v887
      %v889 = vrot.slane %v882, %v888
      %v890 = vcombine.low %v865, %v873
      %v892 = vunpack.c.l.s4 1934713408
      %v893 = vunpack.c.0.s8 %v892
      %v894 = vlaneseq
      %v895 = vshrl.u32 %v894, 7
      %v896 = vsub.s32 %v893, %v895
      %v897 = vrot.slane %v890, %v896
      %v898 = vcombine.low %v881, %v889
      %v900 = vunpack.c.l.s4 1934713408
      %v901 = vunpack.c.0.s8 %v900
      %v902 = vlaneseq
      %v903 = vshrl.u32 %v902, 7
      %v904 = vsub.s32 %v901, %v903
      %v905 = vrot.slane %v898, %v904
      %v906 = vcombine.low %v897, %v905
      %v907 = vcombine.high %v897, %v905
      %909 = vrot.lane.b32.xlu0 %v907, 64
      %v910 = vpop.permute.xlu0 %909
      %v912 = vsel %vm681, %v906, %v910
      %v913 = vrot.slane %v912, 4
      %v914 = vadd.f32 %v912, %v913
      %v915 = vrot.slane %v914, 2
      %v916 = vadd.f32 %v914, %v915
      %v917 = vrot.slane %v916, 1
      %v918 = vadd.f32 %v916, %v917
      %v919 = vrcp.pop 8.0
      %v920 = vmul.f32 %v918, %v919
      %v921 = vsub.f32 %v912, %v920
      %v922 = vmul.f32 %v921, %v921
      %v923 = vrot.slane %v922, 4
      %v924 = vadd.f32 %v922, %v923
      %v925 = vrot.slane %v924, 2
      %v926 = vadd.f32 %v924, %v925
      %v927 = vrot.slane %v926, 1
      %v928 = vadd.f32 %v926, %v927
      %v929 = vmul.f32 %v928, %v919
      %v930 = vld [vmem:[%s3] sm:$0x1]
      %v932 = vlaneseq
      %v933 = vshrl.u32 %v932, 7
      %v934 = vsub.s32 0, %v933
      %v935 = vrot.slane %v930, %v934
      %v937 = vmul.f32 %v935, %v921
      %v938 = vadd.f32 %v929, 1e-05
      %v939 = vrsqrt.pop %v938
      %v940 = vmul.f32 %v937, %v939
      %v941 = vld [vmem:[%s4] sm:$0x1]
      %v943 = vlaneseq
      %v944 = vshrl.u32 %v943, 7
      %v945 = vsub.s32 0, %v944
      %v946 = vrot.slane %v941, %v945
      %v948 = vadd.f32 %v940, %v946
      %v949 = vmax.f32 %v948, 0.0
      %v950 = vpack.c.bf16 %v949, %v949
      %951 = vst [vmem:[#allocation2] sm:$0xf] %v950
    $region41: #{tpu_custom_call.1} parent=1 // pred_fallthru
      _
    %v952 = vld [vmem:[#allocation2] sm:$0xf]
    %v953 = vld [vmem:[%s5] sm:$0xf]
    %v954 = vld [vmem:[%s5 + $0x4] sm:$0xf]
    %v955 = vld [vmem:[%s5 + $0x8] sm:$0xf]
    %v956 = vld [vmem:[%s5 + $0xc] sm:$0xf]
    %v957 = vld [vmem:[%s5 + $0x10] sm:$0xf]
    %v958 = vld [vmem:[%s5 + $0x14] sm:$0xf]
    %v959 = vld [vmem:[%s5 + $0x18] sm:$0xf]
    %v960 = vld [vmem:[%s5 + $0x1c] sm:$0xf]
    %v961 = vld [vmem:[%s5 + $0x20] sm:$0xf]
    %v962 = vld [vmem:[%s5 + $0x24] sm:$0xf]
    %v963 = vld [vmem:[%s5 + $0x28] sm:$0xf]
    %v964 = vld [vmem:[%s5 + $0x2c] sm:$0xf]
    %v965 = vld [vmem:[%s5 + $0x30] sm:$0xf]
    %v966 = vld [vmem:[%s5 + $0x34] sm:$0xf]
    %v967 = vld [vmem:[%s5 + $0x38] sm:$0xf]
    %v968 = vld [vmem:[%s5 + $0x3c] sm:$0xf]
    %v969 = vld [vmem:[%s6] sm:$0x1]
    %v971 = vlaneseq
    %v972 = vshrl.u32 %v971, 7
    %v973 = vsub.s32 0, %v972
    %v974 = vrot.slane %v969, %v973
    %v992 = vunpack.c.l.b16 %v953
    %v993 = vunpack.c.l.b16 %v954
    %v994 = vunpack.c.l.b16 %v955
    %v995 = vunpack.c.l.b16 %v956
    %v996 = vunpack.c.l.b16 %v957
    %v997 = vunpack.c.l.b16 %v958
    %v998 = vunpack.c.l.b16 %v959
    %v999 = vunpack.c.l.b16 %v960
    %v1000 = vunpack.c.l.b16 %v961
    %v1001 = vunpack.c.l.b16 %v962
    %v1002 = vunpack.c.l.b16 %v963
    %v1003 = vunpack.c.l.b16 %v964
    %v1004 = vunpack.c.l.b16 %v965
    %v1005 = vunpack.c.l.b16 %v966
    %v1006 = vunpack.c.l.b16 %v967
    %v1007 = vunpack.c.l.b16 %v968
    %v1008 = vpack.c.b16 %v993, %v992
    %v1009 = vpack.c.b16 %v995, %v994
    %v1010 = vpack.c.b16 %v997, %v996
    %v1011 = vpack.c.b16 %v999, %v998
    %v1012 = vpack.c.b16 %v1001, %v1000
    %v1013 = vpack.c.b16 %v1003, %v1002
    %v1014 = vpack.c.b16 %v1005, %v1004
    %v1015 = vpack.c.b16 %v1007, %v1006
    %1024 = vmatprep.subr.bf16.mxu0 0
    %1025 = vmatpush1.bf16.msra.mxu0 %v1008
    %1026 = vmatprep.subr.bf16.mxu0 0
    %1027 = vmatpush1.bf16.msra.mxu0 %v1009
    %1028 = vmatprep.subr.bf16.mxu0 0
    %1029 = vmatpush1.bf16.msra.mxu0 %v1010
    %1030 = vmatprep.subr.bf16.mxu0 0
    %1031 = vmatpush1.bf16.msra.mxu0 %v1011
    %1032 = vmatprep.subr.bf16.mxu0 0
    %1033 = vmatpush1.bf16.msra.mxu0 %v1012
    %1034 = vmatprep.subr.bf16.mxu0 0
    %1035 = vmatpush1.bf16.msra.mxu0 %v1013
    %1036 = vmatprep.subr.bf16.mxu0 0
    %1037 = vmatpush1.bf16.msra.mxu0 %v1014
    %1038 = vmatprep.subr.bf16.mxu0 0
    %1039 = vmatpush1.bf16.msra.mxu0 %v1015
    %1040 = vmatprep.subr.bf16.mxu0 0
    %1041 = vmatpush1.bf16.msra.mxu0 0
    %1042 = vmatprep.subr.bf16.mxu0 0
    %1043 = vmatpush1.bf16.msra.mxu0 0
    %1044 = vmatprep.subr.bf16.mxu0 0
    %1045 = vmatpush1.bf16.msra.mxu0 0
    %1046 = vmatprep.subr.bf16.mxu0 0
    %1047 = vmatpush1.bf16.msra.mxu0 0
    %1048 = vmatprep.subr.bf16.mxu0 0
    %1049 = vmatpush1.bf16.msra.mxu0 0
    %1050 = vmatprep.subr.bf16.mxu0 0
    %1051 = vmatpush1.bf16.msra.mxu0 0
    %1052 = vmatprep.subr.bf16.mxu0 0
    %1053 = vmatpush1.bf16.msra.mxu0 0
    %1054 = vmatprep.subr.bf16.mxu0 0
    %1055 = vmatpush1.bf16.msra.mxu0 0
    %1056 = vmatprep.mubr.bf16.mxu0 0
    %1057 = vmatmul.mubr.bf16.gmra.mrb[0].mxu0 %v952
    %v1058 = vpop.f32.mrb[0].mxu0
    %v1059 = vadd.f32 %v974, %v1058
    %v1060 = vpop.f32.mrb[0].mxu0
    %v1061 = vpop.f32.mrb[0].mxu0
    %v1062 = vpop.f32.mrb[0].mxu0
    %1063 = vdwg.mxu0
    %v1064 = vmax.f32 %v1059, 0.0
    %v1065 = vpack.c.bf16 %v1064, %v1064
    %v1066 = vld [vmem:[%s7] sm:$0xf]
    %v1067 = vld [vmem:[%s7 + $0x4] sm:$0xf]
    %v1068 = vld [vmem:[%s7 + $0x8] sm:$0xf]
    %v1069 = vld [vmem:[%s7 + $0xc] sm:$0xf]
    %v1070 = vld [vmem:[%s7 + $0x10] sm:$0xf]
    %v1071 = vld [vmem:[%s7 + $0x14] sm:$0xf]
    %v1072 = vld [vmem:[%s7 + $0x18] sm:$0xf]
    %v1073 = vld [vmem:[%s7 + $0x1c] sm:$0xf]
    %v1082 = vunpack.c.l.b16 %v1066
    %v1083 = vunpack.c.l.b16 %v1067
    %v1084 = vunpack.c.l.b16 %v1068
    %v1085 = vunpack.c.l.b16 %v1069
    %v1086 = vunpack.c.l.b16 %v1070
    %v1087 = vunpack.c.l.b16 %v1071
    %v1088 = vunpack.c.l.b16 %v1072
    %v1089 = vunpack.c.l.b16 %v1073
    %v1090 = vpack.c.b16 %v1083, %v1082
    %v1091 = vpack.c.b16 %v1085, %v1084
    %v1092 = vpack.c.b16 %v1087, %v1086
    %v1093 = vpack.c.b16 %v1089, %v1088
    %vm1098 = vcmask 523264
    %v1100 = vsel %vm1098, %v1065, 0
    %1102 = vmatprep.subr.bf16.mxu0 0
    %1103 = vmatpush1.bf16.msra.mxu0 %v1090
    %1104 = vmatprep.subr.bf16.mxu0 0
    %1105 = vmatpush1.bf16.msra.mxu0 %v1091
    %1106 = vmatprep.subr.bf16.mxu0 0
    %1107 = vmatpush1.bf16.msra.mxu0 %v1092
    %1108 = vmatprep.subr.bf16.mxu0 0
    %1109 = vmatpush1.bf16.msra.mxu0 %v1093
    %1110 = vmatprep.subr.bf16.mxu0 0
    %1111 = vmatpush1.bf16.msra.mxu0 0
    %1112 = vmatprep.subr.bf16.mxu0 0
    %1113 = vmatpush1.bf16.msra.mxu0 0
    %1114 = vmatprep.subr.bf16.mxu0 0
    %1115 = vmatpush1.bf16.msra.mxu0 0
    %1116 = vmatprep.subr.bf16.mxu0 0
    %1117 = vmatpush1.bf16.msra.mxu0 0
    %1118 = vmatprep.subr.bf16.mxu0 0
    %1119 = vmatpush1.bf16.msra.mxu0 0
    %1120 = vmatprep.subr.bf16.mxu0 0
    %1121 = vmatpush1.bf16.msra.mxu0 0
    %1122 = vmatprep.subr.bf16.mxu0 0
    %1123 = vmatpush1.bf16.msra.mxu0 0
    %1124 = vmatprep.subr.bf16.mxu0 0
    %1125 = vmatpush1.bf16.msra.mxu0 0
    %1126 = vmatprep.subr.bf16.mxu0 0
    %1127 = vmatpush1.bf16.msra.mxu0 0
    %1128 = vmatprep.subr.bf16.mxu0 0
    %1129 = vmatpush1.bf16.msra.mxu0 0
    %1130 = vmatprep.subr.bf16.mxu0 0
    %1131 = vmatpush1.bf16.msra.mxu0 0
    %1132 = vmatprep.subr.bf16.mxu0 0
    %1133 = vmatpush1.bf16.msra.mxu0 0
    %1134 = vmatprep.mubr.bf16.mxu0 0
    %1135 = vmatmul.mubr.bf16.gmra.mrb[0].mxu0 %v1100
    %v1136 = vpop.f32.mrb[0].mxu0
    %v1137 = vadd.f32 0.0, %v1136
    %v1138 = vpop.f32.mrb[0].mxu0
    %v1139 = vpop.f32.mrb[0].mxu0
    %v1140 = vpop.f32.mrb[0].mxu0
    %1141 = vdwg.mxu0
    // Predicated region
    $region42: #{tpu_custom_call.1} parent=1 // pred_check
      %p1142 = pneg %p34
    $region43: #{tpu_custom_call.1} parent=1 // pred_check_branch
      %1144 = sbr.rel (%p1142) target = $region45
    $region44: #{tpu_custom_call.1} parent=1 // pred_region
      %1145 = vst.msk [vmem:[#allocation3] sm:$0xff] %vm1098, 0.0
    $region45: #{tpu_custom_call.1} parent=1 // pred_fallthru
      _
    %v1146 = vld [vmem:[#allocation3] sm:$0xff]
    %v1147 = vadd.f32 %v1146, %v1137
    %1148 = vst.msk [vmem:[#allocation3] sm:$0xff] %vm1098, %v1147
    // Predicated region
    $region46: #{tpu_custom_call.1} parent=1 // pred_check
      %p1149 = pneg %p34
    $region47: #{tpu_custom_call.1} parent=1 // pred_check_branch
      %1151 = sbr.rel (%p1149) target = $region49
    $region48: #{tpu_custom_call.1} parent=1 // pred_region
      %v1152 = vld [vmem:[#allocation3] sm:$0xff]
      %v1153 = vld [vmem:[%s8] sm:$0x1]
      %v1155 = vlaneseq
      %v1156 = vshrl.u32 %v1155, 7
      %v1157 = vsub.s32 0, %v1156
      %v1158 = vrot.slane %v1153, %v1157
      %v1160 = vadd.f32 %v1152, %v1158
      %1161 = vst.msk [vmem:[#allocation3] sm:$0xff] %vm1098, %v1160
    $region49: #{tpu_custom_call.1} parent=1 // pred_fallthru
      _
    // Predicated region
    $region50: #{tpu_custom_call.1} parent=1 // pred_check
      _
    $region51: #{tpu_custom_call.1} parent=1 // pred_check_branch
      %1163 = sbr.rel (0) target = $region53
    $region52: #{tpu_custom_call.1} parent=1 // pred_region
      %s1165 = ssub.s32 128, 128
      %1166 = vsyncadd [#allocation4], %s1165
      %s1168 = sshll.u32 [#allocation3], 4
      %s1169 = int_to_ptr.vmem [resolvable:$true] %s1168
      %1171 = dma.vmem_to_hbm [thread:$0]  %s1169, 128, %s9, [#allocation4]
    $region53: #{tpu_custom_call.1} parent=1 // pred_fallthru
      _
    // Predicated region
    $region54: #{tpu_custom_call.1} parent=1 // pred_check
      _
    $region55: #{tpu_custom_call.1} parent=1 // pred_check_branch
      %1173 = sbr.rel (0) target = $region57
    $region56: #{tpu_custom_call.1} parent=1 // pred_region
      %1174 = dma.done [#allocation4], 128
    $region57: #{tpu_custom_call.1} parent=1 // pred_fallthru
      _
    %1175 = vsyncpa [#allocation4], 1

// kernel: tpu_custom_call.1
$region0: #{tpu_custom_call.1}
  #allocation0 [shape = 'u32[]', space=smem, size = 0x4, offset = 0x4, fixed_abs, tag = 'smem constant byte address 0x4 - core index']
  #allocation1 [shape = 'u32[144,128]{1,0:T(1,128)}', space=vmem, size = 0x12000, scoped, tag = 'internal scratch']
  #allocation2 [shape = 'bf16[8,128]{1,0:T(8,128)(2,1)}', space=vmem, size = 0x800, scoped, tag = 'scratch operand']
  %s0 = inlined_call_operand.vmem [shape: f32[8,16,5], index: 0, kind: input, shape index: {}]
  %s1 = inlined_call_operand.vmem [shape: bf16[3,5,64], index: 1, kind: input, shape index: {}]
  %s2 = inlined_call_operand.vmem [shape: f32[1,64], index: 2, kind: input, shape index: {}]
  %s3 = inlined_call_operand.vmem [shape: f32[1,128], index: 3, kind: input, shape index: {}]
  %s4 = inlined_call_operand.vmem [shape: f32[1,128], index: 4, kind: input, shape index: {}]
  %s5 = inlined_call_operand.vmem [shape: bf16[1,128,64], index: 5, kind: input, shape index: {}]
  %s6 = inlined_call_operand.vmem [shape: f32[1,64], index: 6, kind: input, shape index: {}]
  %s7 = inlined_call_operand.vmem [shape: bf16[64,64], index: 7, kind: input, shape index: {}]
  %s8 = inlined_call_operand.vmem [shape: f32[1,64], index: 8, kind: input, shape index: {}]
  %s9 = inlined_call_operand.hbm [shape: f32[8,64], index: 9, kind: output, shape index: {}]
  %s10 = sld [smem:[#allocation0]]
  $region58: #{tpu_custom_call.1} parent=0
    _
  %s12 = ssub.s32 1, %s10
  %s13 = scalar_select 0, %s12, %s10
  $region1: #{tpu_custom_call.1} parent=0
    #allocation3 [shape = 'u8[4096]{0}', space=vmem, size = 0x1000, scoped, tag = 'output window, operand 0, single buffered']
    #allocation4 [shape = 's32[1]{0}', space=sflag, size = 0x4, scoped, tag = 'scoped memory for tpu_custom_call.1']
    %14 = vsyncpa [#allocation4], 0
    // Predicated region
    $region2: #{tpu_custom_call.1} parent=1 // pred_check
      _
    $region3: #{tpu_custom_call.1} parent=1 // pred_check_branch
      %16 = sbr.rel (0) target = $region5
    $region4: #{tpu_custom_call.1} parent=1 // pred_region
      _
    $region5: #{tpu_custom_call.1} parent=1 // pred_fallthru
      _
    // Predicated region
    $region6: #{tpu_custom_call.1} parent=1 // pred_check
      _
    $region7: #{tpu_custom_call.1} parent=1 // pred_check_branch
      %18 = sbr.rel (0) target = $region9
    $region8: #{tpu_custom_call.1} parent=1 // pred_region
      _
    $region9: #{tpu_custom_call.1} parent=1 // pred_fallthru
      _
    // Predicated region
    $region10: #{tpu_custom_call.1} parent=1 // pred_check
      _
    $region11: #{tpu_custom_call.1} parent=1 // pred_check_branch
      %20 = sbr.rel (0) target = $region13
    $region12: #{tpu_custom_call.1} parent=1 // pred_region
      _
    $region13: #{tpu_custom_call.1} parent=1 // pred_fallthru
      _
    // Predicated region
    $region14: #{tpu_custom_call.1} parent=1 // pred_check
      _
    $region15: #{tpu_custom_call.1} parent=1 // pred_check_branch
      %22 = sbr.rel (0) target = $region17
    $region16: #{tpu_custom_call.1} parent=1 // pred_region
      _
    $region17: #{tpu_custom_call.1} parent=1 // pred_fallthru
      _
    // Predicated region
    $region18: #{tpu_custom_call.1} parent=1 // pred_check
      _
    $region19: #{tpu_custom_call.1} parent=1 // pred_check_branch
      %24 = sbr.rel (0) target = $region21
    $region20: #{tpu_custom_call.1} parent=1 // pred_region
      _
    $region21: #{tpu_custom_call.1} parent=1 // pred_fallthru
      _
    // Predicated region
    $region22: #{tpu_custom_call.1} parent=1 // pred_check
      _
    $region23: #{tpu_custom_call.1} parent=1 // pred_check_branch
      %26 = sbr.rel (0) target = $region25
    $region24: #{tpu_custom_call.1} parent=1 // pred_region
      _
    $region25: #{tpu_custom_call.1} parent=1 // pred_fallthru
      _
    // Predicated region
    $region26: #{tpu_custom_call.1} parent=1 // pred_check
      _
    $region27: #{tpu_custom_call.1} parent=1 // pred_check_branch
      %28 = sbr.rel (0) target = $region29
    $region28: #{tpu_custom_call.1} parent=1 // pred_region
      _
    $region29: #{tpu_custom_call.1} parent=1 // pred_fallthru
      _
    // Predicated region
    $region30: #{tpu_custom_call.1} parent=1 // pred_check
      _
    $region31: #{tpu_custom_call.1} parent=1 // pred_check_branch
      %30 = sbr.rel (0) target = $region33
    $region32: #{tpu_custom_call.1} parent=1 // pred_region
      _
    $region33: #{tpu_custom_call.1} parent=1 // pred_fallthru
      _
    // Predicated region
    $region34: #{tpu_custom_call.1} parent=1 // pred_check
      _
    $region35: #{tpu_custom_call.1} parent=1 // pred_check_branch
      %32 = sbr.rel (0) target = $region37
    $region36: #{tpu_custom_call.1} parent=1 // pred_region
      _
    $region37: #{tpu_custom_call.1} parent=1 // pred_fallthru
      _
    %p34 = scmp.eq.s32.totalorder 0, 0
    // Predicated region
    $region38: #{tpu_custom_call.1} parent=1 // pred_check
      %p35 = pneg %p34
    $region39: #{tpu_custom_call.1} parent=1 // pred_check_branch
      %37 = sbr.rel (%p35) target = $region41
    $region40: #{tpu_custom_call.1} parent=1 // pred_region
      %v38 = vld [vmem:[%s0] sm:$0xff]
      %v39 = vld [vmem:[%s0 + $0x8] sm:$0xff]
      %v40 = vld [vmem:[%s0 + $0x10] sm:$0xff]
      %v41 = vld [vmem:[%s0 + $0x18] sm:$0xff]
      %v42 = vld [vmem:[%s0 + $0x20] sm:$0xff]
      %v43 = vld [vmem:[%s0 + $0x28] sm:$0xff]
      %v44 = vld [vmem:[%s0 + $0x30] sm:$0xff]
      %v45 = vld [vmem:[%s0 + $0x38] sm:$0xff]
      %v46 = vld [vmem:[%s0 + $0x40] sm:$0xff]
      %v47 = vld [vmem:[%s0 + $0x48] sm:$0xff]
      %v48 = vld [vmem:[%s0 + $0x50] sm:$0xff]
      %v49 = vld [vmem:[%s0 + $0x58] sm:$0xff]
      %v50 = vld [vmem:[%s0 + $0x60] sm:$0xff]
      %v51 = vld [vmem:[%s0 + $0x68] sm:$0xff]
      %v52 = vld [vmem:[%s0 + $0x70] sm:$0xff]
      %v53 = vld [vmem:[%s0 + $0x78] sm:$0xff]
      %v54 = vpack.c.bf16 %v39, %v38
      %v55 = vpack.c.bf16 %v41, %v40
      %v56 = vpack.c.bf16 %v43, %v42
      %v57 = vpack.c.bf16 %v45, %v44
      %v58 = vpack.c.bf16 %v47, %v46
      %v59 = vpack.c.bf16 %v49, %v48
      %v60 = vpack.c.bf16 %v51, %v50
      %v61 = vpack.c.bf16 %v53, %v52
      %v63 = vshrl.u32 %v54, 16
      %v65 = vrot.slane %v63, 7
      %v66 = vshll.u32 %v54, 16
      %v68 = vor.u32 %v65, %v66
      %v70 = vshrl.u32 %v55, 16
      %v72 = vrot.slane %v70, 7
      %v73 = vshll.u32 %v55, 16
      %v75 = vor.u32 %v72, %v73
      %v77 = vshrl.u32 %v56, 16
      %v79 = vrot.slane %v77, 7
      %v80 = vshll.u32 %v56, 16
      %v82 = vor.u32 %v79, %v80
      %v84 = vshrl.u32 %v57, 16
      %v86 = vrot.slane %v84, 7
      %v87 = vshll.u32 %v57, 16
      %v89 = vor.u32 %v86, %v87
      %v91 = vshrl.u32 %v58, 16
      %v93 = vrot.slane %v91, 7
      %v94 = vshll.u32 %v58, 16
      %v96 = vor.u32 %v93, %v94
      %v98 = vshrl.u32 %v59, 16
      %v100 = vrot.slane %v98, 7
      %v101 = vshll.u32 %v59, 16
      %v103 = vor.u32 %v100, %v101
      %v105 = vshrl.u32 %v60, 16
      %v107 = vrot.slane %v105, 7
      %v108 = vshll.u32 %v60, 16
      %v110 = vor.u32 %v107, %v108
      %v112 = vshrl.u32 %v61, 16
      %v114 = vrot.slane %v112, 7
      %v115 = vshll.u32 %v61, 16
      %v117 = vor.u32 %v114, %v115
      %vm134 = vcmask 1040384
      %vm135 = vsmask.f32 256
      %vm136 = vmand %vm134, %vm135
      %v137 = vsel %vm136, 0, %v68
      %v138 = vsel %vm136, 0, %v75
      %v139 = vsel %vm136, 0, %v82
      %v140 = vsel %vm136, 0, %v89
      %v141 = vsel %vm136, 0, %v96
      %v142 = vsel %vm136, 0, %v103
      %v143 = vsel %vm136, 0, %v110
      %v144 = vsel %vm136, 0, %v117
      %v145 = vsel %vm136, %v65, 0
      %v146 = vsel %vm136, %v72, 0
      %v147 = vsel %vm136, %v79, 0
      %v148 = vsel %vm136, %v86, 0
      %v149 = vsel %vm136, %v93, 0
      %v150 = vsel %vm136, %v100, 0
      %v151 = vsel %vm136, %v107, 0
      %v152 = vsel %vm136, %v114, 0
      %v153 = vld [vmem:[%s1] sm:$0x7]
      %vm154 = vsmask.f32 7424
      %v156 = vshrl.u32 %v137, 16
      %v158 = vshll.u32 %v137, 16
      %v160 = vrot.slane %v158, 1
      %v161 = vor.u32 %v156, %v160
      %v163 = vshll.u32 %v145, 16
      %v165 = vrot.slane %v163, 1
      %v166 = vsel %vm154, %v161, %v165
      %v168 = vshrl.u32 %v138, 16
      %v170 = vshll.u32 %v138, 16
      %v172 = vrot.slane %v170, 1
      %v173 = vor.u32 %v168, %v172
      %v175 = vshll.u32 %v146, 16
      %v177 = vrot.slane %v175, 1
      %v178 = vsel %vm154, %v173, %v177
      %v180 = vshrl.u32 %v139, 16
      %v182 = vshll.u32 %v139, 16
      %v184 = vrot.slane %v182, 1
      %v185 = vor.u32 %v180, %v184
      %v187 = vshll.u32 %v147, 16
      %v189 = vrot.slane %v187, 1
      %v190 = vsel %vm154, %v185, %v189
      %v192 = vshrl.u32 %v140, 16
      %v194 = vshll.u32 %v140, 16
      %v196 = vrot.slane %v194, 1
      %v197 = vor.u32 %v192, %v196
      %v199 = vshll.u32 %v148, 16
      %v201 = vrot.slane %v199, 1
      %v202 = vsel %vm154, %v197, %v201
      %v204 = vshrl.u32 %v141, 16
      %v206 = vshll.u32 %v141, 16
      %v208 = vrot.slane %v206, 1
      %v209 = vor.u32 %v204, %v208
      %v211 = vshll.u32 %v149, 16
      %v213 = vrot.slane %v211, 1
      %v214 = vsel %vm154, %v209, %v213
      %v216 = vshrl.u32 %v142, 16
      %v218 = vshll.u32 %v142, 16
      %v220 = vrot.slane %v218, 1
      %v221 = vor.u32 %v216, %v220
      %v223 = vshll.u32 %v150, 16
      %v225 = vrot.slane %v223, 1
      %v226 = vsel %vm154, %v221, %v225
      %v228 = vshrl.u32 %v143, 16
      %v230 = vshll.u32 %v143, 16
      %v232 = vrot.slane %v230, 1
      %v233 = vor.u32 %v228, %v232
      %v235 = vshll.u32 %v151, 16
      %v237 = vrot.slane %v235, 1
      %v238 = vsel %vm154, %v233, %v237
      %v240 = vshrl.u32 %v144, 16
      %v242 = vshll.u32 %v144, 16
      %v244 = vrot.slane %v242, 1
      %v245 = vor.u32 %v240, %v244
      %v247 = vshll.u32 %v152, 16
      %v249 = vrot.slane %v247, 1
      %v250 = vsel %vm154, %v245, %v249
      %s251 = scalar_lea.vmem %s1, 4
      %v252 = vld [vmem:[%s251] sm:$0x7]
      %vm253 = vcmask 39936
      %v255 = vsel %vm253, %v166, 0
      %v258 = vsel %vm253, %v178, 0
      %v261 = vsel %vm253, %v190, 0
      %v264 = vsel %vm253, %v202, 0
      %v267 = vsel %vm253, %v214, 0
      %v270 = vsel %vm253, %v226, 0
      %v273 = vsel %vm253, %v238, 0
      %v276 = vsel %vm253, %v250, 0
      %vm278 = vcmask 1041408
      %vm279 = vcmask 1042432
      %v280 = vsel %vm278, 4294967295, 65535
      %v281 = vsel %vm279, %v280, 0
      %v283 = vand.u32 %v252, %v281
      %285 = vmatprep.subr.bf16.mxu0 0
      %286 = vmatpush1.bf16.msra.mxu0 %v283
      %287 = vmatprep.subr.bf16.mxu0 0
      %288 = vmatpush1.bf16.msra.mxu0 0
      %289 = vmatprep.subr.bf16.mxu0 0
      %290 = vmatpush1.bf16.msra.mxu0 0
      %291 = vmatprep.subr.bf16.mxu0 0
      %292 = vmatpush1.bf16.msra.mxu0 0
      %293 = vmatprep.subr.bf16.mxu0 0
      %294 = vmatpush1.bf16.msra.mxu0 0
      %295 = vmatprep.subr.bf16.mxu0 0
      %296 = vmatpush1.bf16.msra.mxu0 0
      %297 = vmatprep.subr.bf16.mxu0 0
      %298 = vmatpush1.bf16.msra.mxu0 0
      %299 = vmatprep.subr.bf16.mxu0 0
      %300 = vmatpush1.bf16.msra.mxu0 0
      %301 = vmatprep.subr.bf16.mxu0 0
      %302 = vmatpush1.bf16.msra.mxu0 0
      %303 = vmatprep.subr.bf16.mxu0 0
      %304 = vmatpush1.bf16.msra.mxu0 0
      %305 = vmatprep.subr.bf16.mxu0 0
      %306 = vmatpush1.bf16.msra.mxu0 0
      %307 = vmatprep.subr.bf16.mxu0 0
      %308 = vmatpush1.bf16.msra.mxu0 0
      %309 = vmatprep.subr.bf16.mxu0 0
      %310 = vmatpush1.bf16.msra.mxu0 0
      %311 = vmatprep.subr.bf16.mxu0 0
      %312 = vmatpush1.bf16.msra.mxu0 0
      %313 = vmatprep.subr.bf16.mxu0 0
      %314 = vmatpush1.bf16.msra.mxu0 0
      %315 = vmatprep.subr.bf16.mxu0 0
      %316 = vmatpush1.bf16.msra.mxu0 0
      %317 = vmatprep.mubr.bf16.mxu0 0
      %318 = vmatmul.mubr.bf16.gmra.mrb[0].mxu0 %v255
      %v319 = vpop.f32.mrb[0].mxu0
      %v320 = vadd.f32 0.0, %v319
      %v321 = vpop.f32.mrb[0].mxu0
      %v322 = vpop.f32.mrb[0].mxu0
      %v323 = vadd.f32 0.0, %v322
      %v324 = vpop.f32.mrb[0].mxu0
      %325 = vmatprep.mubr.bf16.mxu0 0
      %326 = vmatmul.mubr.bf16.gmra.mrb[0].mxu0 %v258
      %v327 = vpop.f32.mrb[0].mxu0
      %v328 = vadd.f32 0.0, %v327
      %v329 = vpop.f32.mrb[0].mxu0
      %v330 = vpop.f32.mrb[0].mxu0
      %v331 = vadd.f32 0.0, %v330
      %v332 = vpop.f32.mrb[0].mxu0
      %333 = vmatprep.mubr.bf16.mxu0 0
      %334 = vmatmul.mubr.bf16.gmra.mrb[0].mxu0 %v261
      %v335 = vpop.f32.mrb[0].mxu0
      %v336 = vadd.f32 0.0, %v335
      %v337 = vpop.f32.mrb[0].mxu0
      %v338 = vpop.f32.mrb[0].mxu0
      %v339 = vadd.f32 0.0, %v338
      %v340 = vpop.f32.mrb[0].mxu0
      %341 = vmatprep.mubr.bf16.mxu0 0
      %342 = vmatmul.mubr.bf16.gmra.mrb[0].mxu0 %v264
      %v343 = vpop.f32.mrb[0].mxu0
      %v344 = vadd.f32 0.0, %v343
      %v345 = vpop.f32.mrb[0].mxu0
      %v346 = vpop.f32.mrb[0].mxu0
      %v347 = vadd.f32 0.0, %v346
      %v348 = vpop.f32.mrb[0].mxu0
      %349 = vmatprep.mubr.bf16.mxu0 0
      %350 = vmatmul.mubr.bf16.gmra.mrb[0].mxu0 %v267
      %v351 = vpop.f32.mrb[0].mxu0
      %v352 = vadd.f32 0.0, %v351
      %v353 = vpop.f32.mrb[0].mxu0
      %v354 = vpop.f32.mrb[0].mxu0
      %v355 = vadd.f32 0.0, %v354
      %v356 = vpop.f32.mrb[0].mxu0
      %357 = vmatprep.mubr.bf16.mxu0 0
      %358 = vmatmul.mubr.bf16.gmra.mrb[0].mxu0 %v270
      %v359 = vpop.f32.mrb[0].mxu0
      %v360 = vadd.f32 0.0, %v359
      %v361 = vpop.f32.mrb[0].mxu0
      %v362 = vpop.f32.mrb[0].mxu0
      %v363 = vadd.f32 0.0, %v362
      %v364 = vpop.f32.mrb[0].mxu0
      %365 = vmatprep.mubr.bf16.mxu0 0
      %366 = vmatmul.mubr.bf16.gmra.mrb[0].mxu0 %v273
      %v367 = vpop.f32.mrb[0].mxu0
      %v368 = vadd.f32 0.0, %v367
      %v369 = vpop.f32.mrb[0].mxu0
      %v370 = vpop.f32.mrb[0].mxu0
      %v371 = vadd.f32 0.0, %v370
      %v372 = vpop.f32.mrb[0].mxu0
      %373 = vmatprep.mubr.bf16.mxu0 0
      %374 = vmatmul.mubr.bf16.gmra.mrb[0].mxu0 %v276
      %v375 = vpop.f32.mrb[0].mxu0
      %v376 = vadd.f32 0.0, %v375
      %v377 = vpop.f32.mrb[0].mxu0
      %v378 = vpop.f32.mrb[0].mxu0
      %v379 = vadd.f32 0.0, %v378
      %v380 = vpop.f32.mrb[0].mxu0
      %381 = vdwg.mxu0
      %v382 = vsel %vm253, %v137, 0
      %v384 = vsel %vm253, %v138, 0
      %v386 = vsel %vm253, %v139, 0
      %v388 = vsel %vm253, %v140, 0
      %v390 = vsel %vm253, %v141, 0
      %v392 = vsel %vm253, %v142, 0
      %v394 = vsel %vm253, %v143, 0
      %v396 = vsel %vm253, %v144, 0
      %v399 = vand.u32 %v153, %v281
      %401 = vmatprep.subr.bf16.mxu0 0
      %402 = vmatpush1.bf16.msra.mxu0 %v399
      %403 = vmatprep.subr.bf16.mxu0 0
      %404 = vmatpush1.bf16.msra.mxu0 0
      %405 = vmatprep.subr.bf16.mxu0 0
      %406 = vmatpush1.bf16.msra.mxu0 0
      %407 = vmatprep.subr.bf16.mxu0 0
      %408 = vmatpush1.bf16.msra.mxu0 0
      %409 = vmatprep.subr.bf16.mxu0 0
      %410 = vmatpush1.bf16.msra.mxu0 0
      %411 = vmatprep.subr.bf16.mxu0 0
      %412 = vmatpush1.bf16.msra.mxu0 0
      %413 = vmatprep.subr.bf16.mxu0 0
      %414 = vmatpush1.bf16.msra.mxu0 0
      %415 = vmatprep.subr.bf16.mxu0 0
      %416 = vmatpush1.bf16.msra.mxu0 0
      %417 = vmatprep.subr.bf16.mxu0 0
      %418 = vmatpush1.bf16.msra.mxu0 0
      %419 = vmatprep.subr.bf16.mxu0 0
      %420 = vmatpush1.bf16.msra.mxu0 0
      %421 = vmatprep.subr.bf16.mxu0 0
      %422 = vmatpush1.bf16.msra.mxu0 0
      %423 = vmatprep.subr.bf16.mxu0 0
      %424 = vmatpush1.bf16.msra.mxu0 0
      %425 = vmatprep.subr.bf16.mxu0 0
      %426 = vmatpush1.bf16.msra.mxu0 0
      %427 = vmatprep.subr.bf16.mxu0 0
      %428 = vmatpush1.bf16.msra.mxu0 0
      %429 = vmatprep.subr.bf16.mxu0 0
      %430 = vmatpush1.bf16.msra.mxu0 0
      %431 = vmatprep.subr.bf16.mxu0 0
      %432 = vmatpush1.bf16.msra.mxu0 0
      %433 = vmatprep.mubr.bf16.mxu0 0
      %434 = vmatmul.mubr.bf16.gmra.mrb[0].mxu0 %v382
      %v435 = vpop.f32.mrb[0].mxu0
      %v436 = vadd.f32 %v320, %v435
      %v437 = vpop.f32.mrb[0].mxu0
      %v438 = vpop.f32.mrb[0].mxu0
      %v439 = vadd.f32 %v323, %v438
      %v440 = vpop.f32.mrb[0].mxu0
      %441 = vmatprep.mubr.bf16.mxu0 0
      %442 = vmatmul.mubr.bf16.gmra.mrb[0].mxu0 %v384
      %v443 = vpop.f32.mrb[0].mxu0
      %v444 = vadd.f32 %v328, %v443
      %v445 = vpop.f32.mrb[0].mxu0
      %v446 = vpop.f32.mrb[0].mxu0
      %v447 = vadd.f32 %v331, %v446
      %v448 = vpop.f32.mrb[0].mxu0
      %449 = vmatprep.mubr.bf16.mxu0 0
      %450 = vmatmul.mubr.bf16.gmra.mrb[0].mxu0 %v386
      %v451 = vpop.f32.mrb[0].mxu0
      %v452 = vadd.f32 %v336, %v451
      %v453 = vpop.f32.mrb[0].mxu0
      %v454 = vpop.f32.mrb[0].mxu0
      %v455 = vadd.f32 %v339, %v454
      %v456 = vpop.f32.mrb[0].mxu0
      %457 = vmatprep.mubr.bf16.mxu0 0
      %458 = vmatmul.mubr.bf16.gmra.mrb[0].mxu0 %v388
      %v459 = vpop.f32.mrb[0].mxu0
      %v460 = vadd.f32 %v344, %v459
      %v461 = vpop.f32.mrb[0].mxu0
      %v462 = vpop.f32.mrb[0].mxu0
      %v463 = vadd.f32 %v347, %v462
      %v464 = vpop.f32.mrb[0].mxu0
      %465 = vmatprep.mubr.bf16.mxu0 0
      %466 = vmatmul.mubr.bf16.gmra.mrb[0].mxu0 %v390
      %v467 = vpop.f32.mrb[0].mxu0
      %v468 = vadd.f32 %v352, %v467
      %v469 = vpop.f32.mrb[0].mxu0
      %v470 = vpop.f32.mrb[0].mxu0
      %v471 = vadd.f32 %v355, %v470
      %v472 = vpop.f32.mrb[0].mxu0
      %473 = vmatprep.mubr.bf16.mxu0 0
      %474 = vmatmul.mubr.bf16.gmra.mrb[0].mxu0 %v392
      %v475 = vpop.f32.mrb[0].mxu0
      %v476 = vadd.f32 %v360, %v475
      %v477 = vpop.f32.mrb[0].mxu0
      %v478 = vpop.f32.mrb[0].mxu0
      %v479 = vadd.f32 %v363, %v478
      %v480 = vpop.f32.mrb[0].mxu0
      %481 = vmatprep.mubr.bf16.mxu0 0
      %482 = vmatmul.mubr.bf16.gmra.mrb[0].mxu0 %v394
      %v483 = vpop.f32.mrb[0].mxu0
      %v484 = vadd.f32 %v368, %v483
      %v485 = vpop.f32.mrb[0].mxu0
      %v486 = vpop.f32.mrb[0].mxu0
      %v487 = vadd.f32 %v371, %v486
      %v488 = vpop.f32.mrb[0].mxu0
      %489 = vmatprep.mubr.bf16.mxu0 0
      %490 = vmatmul.mubr.bf16.gmra.mrb[0].mxu0 %v396
      %v491 = vpop.f32.mrb[0].mxu0
      %v492 = vadd.f32 %v376, %v491
      %v493 = vpop.f32.mrb[0].mxu0
      %v494 = vpop.f32.mrb[0].mxu0
      %v495 = vadd.f32 %v379, %v494
      %v496 = vpop.f32.mrb[0].mxu0
      %497 = vdwg.mxu0
      %vm514 = vcmask 1046528
      %v515 = vrot.slane %v137, 1
      %v516 = vrot.slane %v145, 1
      %v517 = vsel %vm514, %v515, %v516
      %v518 = vrot.slane %v138, 1
      %v519 = vrot.slane %v146, 1
      %v520 = vsel %vm514, %v518, %v519
      %v521 = vrot.slane %v139, 1
      %v522 = vrot.slane %v147, 1
      %v523 = vsel %vm514, %v521, %v522
      %v524 = vrot.slane %v140, 1
      %v525 = vrot.slane %v148, 1
      %v526 = vsel %vm514, %v524, %v525
      %v527 = vrot.slane %v141, 1
      %v528 = vrot.slane %v149, 1
      %v529 = vsel %vm514, %v527, %v528
      %v530 = vrot.slane %v142, 1
      %v531 = vrot.slane %v150, 1
      %v532 = vsel %vm514, %v530, %v531
      %v533 = vrot.slane %v143, 1
      %v534 = vrot.slane %v151, 1
      %v535 = vsel %vm514, %v533, %v534
      %v536 = vrot.slane %v144, 1
      %v537 = vrot.slane %v152, 1
      %v538 = vsel %vm514, %v536, %v537
      %s539 = scalar_lea.vmem %s1, 8
      %v540 = vld [vmem:[%s539] sm:$0x7]
      %v542 = vsel %vm253, %v517, 0
      %v545 = vsel %vm253, %v520, 0
      %v548 = vsel %vm253, %v523, 0
      %v551 = vsel %vm253, %v526, 0
      %v554 = vsel %vm253, %v529, 0
      %v557 = vsel %vm253, %v532, 0
      %v560 = vsel %vm253, %v535, 0
      %v563 = vsel %vm253, %v538, 0
      %v566 = vand.u32 %v540, %v281
      %568 = vmatprep.subr.bf16.mxu0 0
      %569 = vmatpush1.bf16.msra.mxu0 %v566
      %570 = vmatprep.subr.bf16.mxu0 0
      %571 = vmatpush1.bf16.msra.mxu0 0
      %572 = vmatprep.subr.bf16.mxu0 0
      %573 = vmatpush1.bf16.msra.mxu0 0
      %574 = vmatprep.subr.bf16.mxu0 0
      %575 = vmatpush1.bf16.msra.mxu0 0
      %576 = vmatprep.subr.bf16.mxu0 0
      %577 = vmatpush1.bf16.msra.mxu0 0
      %578 = vmatprep.subr.bf16.mxu0 0
      %579 = vmatpush1.bf16.msra.mxu0 0
      %580 = vmatprep.subr.bf16.mxu0 0
      %581 = vmatpush1.bf16.msra.mxu0 0
      %582 = vmatprep.subr.bf16.mxu0 0
      %583 = vmatpush1.bf16.msra.mxu0 0
      %584 = vmatprep.subr.bf16.mxu0 0
      %585 = vmatpush1.bf16.msra.mxu0 0
      %586 = vmatprep.subr.bf16.mxu0 0
      %587 = vmatpush1.bf16.msra.mxu0 0
      %588 = vmatprep.subr.bf16.mxu0 0
      %589 = vmatpush1.bf16.msra.mxu0 0
      %590 = vmatprep.subr.bf16.mxu0 0
      %591 = vmatpush1.bf16.msra.mxu0 0
      %592 = vmatprep.subr.bf16.mxu0 0
      %593 = vmatpush1.bf16.msra.mxu0 0
      %594 = vmatprep.subr.bf16.mxu0 0
      %595 = vmatpush1.bf16.msra.mxu0 0
      %596 = vmatprep.subr.bf16.mxu0 0
      %597 = vmatpush1.bf16.msra.mxu0 0
      %598 = vmatprep.subr.bf16.mxu0 0
      %599 = vmatpush1.bf16.msra.mxu0 0
      %600 = vmatprep.mubr.bf16.mxu0 0
      %601 = vmatmul.mubr.bf16.gmra.mrb[0].mxu0 %v542
      %v602 = vpop.f32.mrb[0].mxu0
      %v603 = vadd.f32 0.0, %v602
      %v604 = vpop.f32.mrb[0].mxu0
      %v605 = vpop.f32.mrb[0].mxu0
      %v606 = vadd.f32 0.0, %v605
      %v607 = vpop.f32.mrb[0].mxu0
      %608 = vmatprep.mubr.bf16.mxu0 0
      %609 = vmatmul.mubr.bf16.gmra.mrb[0].mxu0 %v545
      %v610 = vpop.f32.mrb[0].mxu0
      %v611 = vadd.f32 0.0, %v610
      %v612 = vpop.f32.mrb[0].mxu0
      %v613 = vpop.f32.mrb[0].mxu0
      %v614 = vadd.f32 0.0, %v613
      %v615 = vpop.f32.mrb[0].mxu0
      %616 = vmatprep.mubr.bf16.mxu0 0
      %617 = vmatmul.mubr.bf16.gmra.mrb[0].mxu0 %v548
      %v618 = vpop.f32.mrb[0].mxu0
      %v619 = vadd.f32 0.0, %v618
      %v620 = vpop.f32.mrb[0].mxu0
      %v621 = vpop.f32.mrb[0].mxu0
      %v622 = vadd.f32 0.0, %v621
      %v623 = vpop.f32.mrb[0].mxu0
      %624 = vmatprep.mubr.bf16.mxu0 0
      %625 = vmatmul.mubr.bf16.gmra.mrb[0].mxu0 %v551
      %v626 = vpop.f32.mrb[0].mxu0
      %v627 = vadd.f32 0.0, %v626
      %v628 = vpop.f32.mrb[0].mxu0
      %v629 = vpop.f32.mrb[0].mxu0
      %v630 = vadd.f32 0.0, %v629
      %v631 = vpop.f32.mrb[0].mxu0
      %632 = vmatprep.mubr.bf16.mxu0 0
      %633 = vmatmul.mubr.bf16.gmra.mrb[0].mxu0 %v554
      %v634 = vpop.f32.mrb[0].mxu0
      %v635 = vadd.f32 0.0, %v634
      %v636 = vpop.f32.mrb[0].mxu0
      %v637 = vpop.f32.mrb[0].mxu0
      %v638 = vadd.f32 0.0, %v637
      %v639 = vpop.f32.mrb[0].mxu0
      %640 = vmatprep.mubr.bf16.mxu0 0
      %641 = vmatmul.mubr.bf16.gmra.mrb[0].mxu0 %v557
      %v642 = vpop.f32.mrb[0].mxu0
      %v643 = vadd.f32 0.0, %v642
      %v644 = vpop.f32.mrb[0].mxu0
      %v645 = vpop.f32.mrb[0].mxu0
      %v646 = vadd.f32 0.0, %v645
      %v647 = vpop.f32.mrb[0].mxu0
      %648 = vmatprep.mubr.bf16.mxu0 0
      %649 = vmatmul.mubr.bf16.gmra.mrb[0].mxu0 %v560
      %v650 = vpop.f32.mrb[0].mxu0
      %v651 = vadd.f32 0.0, %v650
      %v652 = vpop.f32.mrb[0].mxu0
      %v653 = vpop.f32.mrb[0].mxu0
      %v654 = vadd.f32 0.0, %v653
      %v655 = vpop.f32.mrb[0].mxu0
      %656 = vmatprep.mubr.bf16.mxu0 0
      %657 = vmatmul.mubr.bf16.gmra.mrb[0].mxu0 %v563
      %v658 = vpop.f32.mrb[0].mxu0
      %v659 = vadd.f32 0.0, %v658
      %v660 = vpop.f32.mrb[0].mxu0
      %v661 = vpop.f32.mrb[0].mxu0
      %v662 = vadd.f32 0.0, %v661
      %v663 = vpop.f32.mrb[0].mxu0
      %664 = vdwg.mxu0
      %v665 = vadd.f32 %v436, %v603
      %v666 = vadd.f32 %v439, %v606
      %v667 = vadd.f32 %v444, %v611
      %v668 = vadd.f32 %v447, %v614
      %v669 = vadd.f32 %v452, %v619
      %v670 = vadd.f32 %v455, %v622
      %v671 = vadd.f32 %v460, %v627
      %v672 = vadd.f32 %v463, %v630
      %v673 = vadd.f32 %v468, %v635
      %v674 = vadd.f32 %v471, %v638
      %v675 = vadd.f32 %v476, %v643
      %v676 = vadd.f32 %v479, %v646
      %v677 = vadd.f32 %v484, %v651
      %v678 = vadd.f32 %v487, %v654
      %v679 = vadd.f32 %v492, %v659
      %v680 = vadd.f32 %v495, %v662
      %vm681 = vcmask 523264
      %v682 = vsel %vm681, %v665, -inf
      %v683 = vrot.slane %v682, 4
      %v684 = vmax.f32 %v682, %v683
      %v685 = vrot.slane %v684, 2
      %v686 = vmax.f32 %v684, %v685
      %v687 = vrot.slane %v686, 1
      %v688 = vmax.f32 %v686, %v687
      %v689 = vsel %vm681, %v666, -inf
      %v690 = vrot.slane %v689, 4
      %v691 = vmax.f32 %v689, %v690
      %v692 = vrot.slane %v691, 2
      %v693 = vmax.f32 %v691, %v692
      %v694 = vrot.slane %v693, 1
      %v695 = vmax.f32 %v693, %v694
      %v696 = vsel %vm681, %v667, -inf
      %v697 = vrot.slane %v696, 4
      %v698 = vmax.f32 %v696, %v697
      %v699 = vrot.slane %v698, 2
      %v700 = vmax.f32 %v698, %v699
      %v701 = vrot.slane %v700, 1
      %v702 = vmax.f32 %v700, %v701
      %v703 = vsel %vm681, %v668, -inf
      %v704 = vrot.slane %v703, 4
      %v705 = vmax.f32 %v703, %v704
      %v706 = vrot.slane %v705, 2
      %v707 = vmax.f32 %v705, %v706
      %v708 = vrot.slane %v707, 1
      %v709 = vmax.f32 %v707, %v708
      %v710 = vsel %vm681, %v669, -inf
      %v711 = vrot.slane %v710, 4
      %v712 = vmax.f32 %v710, %v711
      %v713 = vrot.slane %v712, 2
      %v714 = vmax.f32 %v712, %v713
      %v715 = vrot.slane %v714, 1
      %v716 = vmax.f32 %v714, %v715
      %v717 = vsel %vm681, %v670, -inf
      %v718 = vrot.slane %v717, 4
      %v719 = vmax.f32 %v717, %v718
      %v720 = vrot.slane %v719, 2
      %v721 = vmax.f32 %v719, %v720
      %v722 = vrot.slane %v721, 1
      %v723 = vmax.f32 %v721, %v722
      %v724 = vsel %vm681, %v671, -inf
      %v725 = vrot.slane %v724, 4
      %v726 = vmax.f32 %v724, %v725
      %v727 = vrot.slane %v726, 2
      %v728 = vmax.f32 %v726, %v727
      %v729 = vrot.slane %v728, 1
      %v730 = vmax.f32 %v728, %v729
      %v731 = vsel %vm681, %v672, -inf
      %v732 = vrot.slane %v731, 4
      %v733 = vmax.f32 %v731, %v732
      %v734 = vrot.slane %v733, 2
      %v735 = vmax.f32 %v733, %v734
      %v736 = vrot.slane %v735, 1
      %v737 = vmax.f32 %v735, %v736
      %v738 = vsel %vm681, %v673, -inf
      %v739 = vrot.slane %v738, 4
      %v740 = vmax.f32 %v738, %v739
      %v741 = vrot.slane %v740, 2
      %v742 = vmax.f32 %v740, %v741
      %v743 = vrot.slane %v742, 1
      %v744 = vmax.f32 %v742, %v743
      %v745 = vsel %vm681, %v674, -inf
      %v746 = vrot.slane %v745, 4
      %v747 = vmax.f32 %v745, %v746
      %v748 = vrot.slane %v747, 2
      %v749 = vmax.f32 %v747, %v748
      %v750 = vrot.slane %v749, 1
      %v751 = vmax.f32 %v749, %v750
      %v752 = vsel %vm681, %v675, -inf
      %v753 = vrot.slane %v752, 4
      %v754 = vmax.f32 %v752, %v753
      %v755 = vrot.slane %v754, 2
      %v756 = vmax.f32 %v754, %v755
      %v757 = vrot.slane %v756, 1
      %v758 = vmax.f32 %v756, %v757
      %v759 = vsel %vm681, %v676, -inf
      %v760 = vrot.slane %v759, 4
      %v761 = vmax.f32 %v759, %v760
      %v762 = vrot.slane %v761, 2
      %v763 = vmax.f32 %v761, %v762
      %v764 = vrot.slane %v763, 1
      %v765 = vmax.f32 %v763, %v764
      %v766 = vsel %vm681, %v677, -inf
      %v767 = vrot.slane %v766, 4
      %v768 = vmax.f32 %v766, %v767
      %v769 = vrot.slane %v768, 2
      %v770 = vmax.f32 %v768, %v769
      %v771 = vrot.slane %v770, 1
      %v772 = vmax.f32 %v770, %v771
      %v773 = vsel %vm681, %v678, -inf
      %v774 = vrot.slane %v773, 4
      %v775 = vmax.f32 %v773, %v774
      %v776 = vrot.slane %v775, 2
      %v777 = vmax.f32 %v775, %v776
      %v778 = vrot.slane %v777, 1
      %v779 = vmax.f32 %v777, %v778
      %v780 = vsel %vm681, %v679, -inf
      %v781 = vrot.slane %v780, 4
      %v782 = vmax.f32 %v780, %v781
      %v783 = vrot.slane %v782, 2
      %v784 = vmax.f32 %v782, %v783
      %v785 = vrot.slane %v784, 1
      %v786 = vmax.f32 %v784, %v785
      %v787 = vsel %vm681, %v680, -inf
      %v788 = vrot.slane %v787, 4
      %v789 = vmax.f32 %v787, %v788
      %v790 = vrot.slane %v789, 2
      %v791 = vmax.f32 %v789, %v790
      %v792 = vrot.slane %v791, 1
      %v793 = vmax.f32 %v791, %v792
      %v794 = vld [vmem:[%s2] sm:$0x1]
      %v796 = vlaneseq
      %v797 = vshrl.u32 %v796, 7
      %v798 = vsub.s32 0, %v797
      %v799 = vrot.slane %v794, %v798
      %v801 = vadd.f32 %v688, %v799
      %v802 = vadd.f32 %v695, %v799
      %v803 = vadd.f32 %v702, %v799
      %v804 = vadd.f32 %v709, %v799
      %v805 = vadd.f32 %v716, %v799
      %v806 = vadd.f32 %v723, %v799
      %v807 = vadd.f32 %v730, %v799
      %v808 = vadd.f32 %v737, %v799
      %v809 = vadd.f32 %v744, %v799
      %v810 = vadd.f32 %v751, %v799
      %v811 = vadd.f32 %v758, %v799
      %v812 = vadd.f32 %v765, %v799
      %v813 = vadd.f32 %v772, %v799
      %v814 = vadd.f32 %v779, %v799
      %v815 = vadd.f32 %v786, %v799
      %v816 = vadd.f32 %v793, %v799
      %v833 = vrot.slane %v802, 7
      %vm834 = vcmask 1041409
      %v835 = vsel %vm834, %v833, %v801
      %v836 = vrot.slane %v804, 7
      %v837 = vsel %vm834, %v836, %v803
      %v838 = vrot.slane %v806, 7
      %v839 = vsel %vm834, %v838, %v805
      %v840 = vrot.slane %v808, 7
      %v841 = vsel %vm834, %v840, %v807
      %v842 = vrot.slane %v810, 7
      %v843 = vsel %vm834, %v842, %v809
      %v844 = vrot.slane %v812, 7
      %v845 = vsel %vm834, %v844, %v811
      %v846 = vrot.slane %v814, 7
      %v847 = vsel %vm834, %v846, %v813
      %v848 = vrot.slane %v816, 7
      %v849 = vsel %vm834, %v848, %v815
      %v858 = vcombine.low %v835, %v839
      %v860 = vunpack.c.l.s4 1983009808
      %v861 = vunpack.c.0.s8 %v860
      %v862 = vlaneseq
      %v863 = vshrl.u32 %v862, 7
      %v864 = vsub.s32 %v861, %v863
      %v865 = vrot.slane %v858, %v864
      %v866 = vcombine.low %v837, %v841
      %v868 = vunpack.c.l.s4 1983009808
      %v869 = vunpack.c.0.s8 %v868
      %v870 = vlaneseq
      %v871 = vshrl.u32 %v870, 7
      %v872 = vsub.s32 %v869, %v871
      %v873 = vrot.slane %v866, %v872
      %v874 = vcombine.low %v843, %v847
      %v876 = vunpack.c.l.s4 1983009808
      %v877 = vunpack.c.0.s8 %v876
      %v878 = vlaneseq
      %v879 = vshrl.u32 %v878, 7
      %v880 = vsub.s32 %v877, %v879
      %v881 = vrot.slane %v874, %v880
      %v882 = vcombine.low %v845, %v849
      %v884 = vunpack.c.l.s4 1983009808
      %v885 = vunpack.c.0.s8 %v884
      %v886 = vlaneseq
      %v887 = vshrl.u32 %v886, 7
      %v888 = vsub.s32 %v885, %v887
      %v889 = vrot.slane %v882, %v888
      %v890 = vcombine.low %v865, %v873
      %v892 = vunpack.c.l.s4 1934713408
      %v893 = vunpack.c.0.s8 %v892
      %v894 = vlaneseq
      %v895 = vshrl.u32 %v894, 7
      %v896 = vsub.s32 %v893, %v895
      %v897 = vrot.slane %v890, %v896
      %v898 = vcombine.low %v881, %v889
      %v900 = vunpack.c.l.s4 1934713408
      %v901 = vunpack.c.0.s8 %v900
      %v902 = vlaneseq
      %v903 = vshrl.u32 %v902, 7
      %v904 = vsub.s32 %v901, %v903
      %v905 = vrot.slane %v898, %v904
      %v906 = vcombine.low %v897, %v905
      %v907 = vcombine.high %v897, %v905
      %909 = vrot.lane.b32.xlu0 %v907, 64
      %v910 = vpop.permute.xlu0 %909
      %v912 = vsel %vm681, %v906, %v910
      %v913 = vrot.slane %v912, 4
      %v914 = vadd.f32 %v912, %v913
      %v915 = vrot.slane %v914, 2
      %v916 = vadd.f32 %v914, %v915
      %v917 = vrot.slane %v916, 1
      %v918 = vadd.f32 %v916, %v917
      %v919 = vrcp.pop 8.0
      %v920 = vmul.f32 %v918, %v919
      %v921 = vsub.f32 %v912, %v920
      %v922 = vmul.f32 %v921, %v921
      %v923 = vrot.slane %v922, 4
      %v924 = vadd.f32 %v922, %v923
      %v925 = vrot.slane %v924, 2
      %v926 = vadd.f32 %v924, %v925
      %v927 = vrot.slane %v926, 1
      %v928 = vadd.f32 %v926, %v927
      %v929 = vmul.f32 %v928, %v919
      %v930 = vld [vmem:[%s3] sm:$0x1]
      %v932 = vlaneseq
      %v933 = vshrl.u32 %v932, 7
      %v934 = vsub.s32 0, %v933
      %v935 = vrot.slane %v930, %v934
      %v937 = vmul.f32 %v935, %v921
      %v938 = vadd.f32 %v929, 1e-05
      %v939 = vrsqrt.pop %v938
      %v940 = vmul.f32 %v937, %v939
      %v941 = vld [vmem:[%s4] sm:$0x1]
      %v943 = vlaneseq
      %v944 = vshrl.u32 %v943, 7
      %v945 = vsub.s32 0, %v944
      %v946 = vrot.slane %v941, %v945
      %v948 = vadd.f32 %v940, %v946
      %v949 = vmax.f32 %v948, 0.0
      %v950 = vpack.c.bf16 %v949, %v949
      %951 = vst [vmem:[#allocation2] sm:$0xf] %v950
    $region41: #{tpu_custom_call.1} parent=1 // pred_fallthru
      _
    %v952 = vld [vmem:[#allocation2] sm:$0xf]
    %v953 = vld [vmem:[%s5] sm:$0xf]
    %v954 = vld [vmem:[%s5 + $0x4] sm:$0xf]
    %v955 = vld [vmem:[%s5 + $0x8] sm:$0xf]
    %v956 = vld [vmem:[%s5 + $0xc] sm:$0xf]
    %v957 = vld [vmem:[%s5 + $0x10] sm:$0xf]
    %v958 = vld [vmem:[%s5 + $0x14] sm:$0xf]
    %v959 = vld [vmem:[%s5 + $0x18] sm:$0xf]
    %v960 = vld [vmem:[%s5 + $0x1c] sm:$0xf]
    %v961 = vld [vmem:[%s5 + $0x20] sm:$0xf]
    %v962 = vld [vmem:[%s5 + $0x24] sm:$0xf]
    %v963 = vld [vmem:[%s5 + $0x28] sm:$0xf]
    %v964 = vld [vmem:[%s5 + $0x2c] sm:$0xf]
    %v965 = vld [vmem:[%s5 + $0x30] sm:$0xf]
    %v966 = vld [vmem:[%s5 + $0x34] sm:$0xf]
    %v967 = vld [vmem:[%s5 + $0x38] sm:$0xf]
    %v968 = vld [vmem:[%s5 + $0x3c] sm:$0xf]
    %v969 = vld [vmem:[%s6] sm:$0x1]
    %v971 = vlaneseq
    %v972 = vshrl.u32 %v971, 7
    %v973 = vsub.s32 0, %v972
    %v974 = vrot.slane %v969, %v973
    %v992 = vunpack.c.l.b16 %v953
    %v993 = vunpack.c.l.b16 %v954
    %v994 = vunpack.c.l.b16 %v955
    %v995 = vunpack.c.l.b16 %v956
    %v996 = vunpack.c.l.b16 %v957
    %v997 = vunpack.c.l.b16 %v958
    %v998 = vunpack.c.l.b16 %v959
    %v999 = vunpack.c.l.b16 %v960
    %v1000 = vunpack.c.l.b16 %v961
    %v1001 = vunpack.c.l.b16 %v962
    %v1002 = vunpack.c.l.b16 %v963
    %v1003 = vunpack.c.l.b16 %v964
    %v1004 = vunpack.c.l.b16 %v965
    %v1005 = vunpack.c.l.b16 %v966
    %v1006 = vunpack.c.l.b16 %v967
    %v1007 = vunpack.c.l.b16 %v968
    %v1008 = vpack.c.b16 %v993, %v992
    %v1009 = vpack.c.b16 %v995, %v994
    %v1010 = vpack.c.b16 %v997, %v996
    %v1011 = vpack.c.b16 %v999, %v998
    %v1012 = vpack.c.b16 %v1001, %v1000
    %v1013 = vpack.c.b16 %v1003, %v1002
    %v1014 = vpack.c.b16 %v1005, %v1004
    %v1015 = vpack.c.b16 %v1007, %v1006
    %1024 = vmatprep.subr.bf16.mxu0 0
    %1025 = vmatpush1.bf16.msra.mxu0 %v1008
    %1026 = vmatprep.subr.bf16.mxu0 0
    %1027 = vmatpush1.bf16.msra.mxu0 %v1009
    %1028 = vmatprep.subr.bf16.mxu0 0
    %1029 = vmatpush1.bf16.msra.mxu0 %v1010
    %1030 = vmatprep.subr.bf16.mxu0 0
    %1031 = vmatpush1.bf16.msra.mxu0 %v1011
    %1032 = vmatprep.subr.bf16.mxu0 0
    %1033 = vmatpush1.bf16.msra.mxu0 %v1012
    %1034 = vmatprep.subr.bf16.mxu0 0
    %1035 = vmatpush1.bf16.msra.mxu0 %v1013
    %1036 = vmatprep.subr.bf16.mxu0 0
    %1037 = vmatpush1.bf16.msra.mxu0 %v1014
    %1038 = vmatprep.subr.bf16.mxu0 0
    %1039 = vmatpush1.bf16.msra.mxu0 %v1015
    %1040 = vmatprep.subr.bf16.mxu0 0
    %1041 = vmatpush1.bf16.msra.mxu0 0
    %1042 = vmatprep.subr.bf16.mxu0 0
    %1043 = vmatpush1.bf16.msra.mxu0 0
    %1044 = vmatprep.subr.bf16.mxu0 0
    %1045 = vmatpush1.bf16.msra.mxu0 0
    %1046 = vmatprep.subr.bf16.mxu0 0
    %1047 = vmatpush1.bf16.msra.mxu0 0
    %1048 = vmatprep.subr.bf16.mxu0 0
    %1049 = vmatpush1.bf16.msra.mxu0 0
    %1050 = vmatprep.subr.bf16.mxu0 0
    %1051 = vmatpush1.bf16.msra.mxu0 0
    %1052 = vmatprep.subr.bf16.mxu0 0
    %1053 = vmatpush1.bf16.msra.mxu0 0
    %1054 = vmatprep.subr.bf16.mxu0 0
    %1055 = vmatpush1.bf16.msra.mxu0 0
    %1056 = vmatprep.mubr.bf16.mxu0 0
    %1057 = vmatmul.mubr.bf16.gmra.mrb[0].mxu0 %v952
    %v1058 = vpop.f32.mrb[0].mxu0
    %v1059 = vadd.f32 %v974, %v1058
    %v1060 = vpop.f32.mrb[0].mxu0
    %v1061 = vpop.f32.mrb[0].mxu0
    %v1062 = vpop.f32.mrb[0].mxu0
    %1063 = vdwg.mxu0
    %v1064 = vmax.f32 %v1059, 0.0
    %v1065 = vpack.c.bf16 %v1064, %v1064
    %v1066 = vld [vmem:[%s7] sm:$0xf]
    %v1067 = vld [vmem:[%s7 + $0x4] sm:$0xf]
    %v1068 = vld [vmem:[%s7 + $0x8] sm:$0xf]
    %v1069 = vld [vmem:[%s7 + $0xc] sm:$0xf]
    %v1070 = vld [vmem:[%s7 + $0x10] sm:$0xf]
    %v1071 = vld [vmem:[%s7 + $0x14] sm:$0xf]
    %v1072 = vld [vmem:[%s7 + $0x18] sm:$0xf]
    %v1073 = vld [vmem:[%s7 + $0x1c] sm:$0xf]
    %v1082 = vunpack.c.l.b16 %v1066
    %v1083 = vunpack.c.l.b16 %v1067
    %v1084 = vunpack.c.l.b16 %v1068
    %v1085 = vunpack.c.l.b16 %v1069
    %v1086 = vunpack.c.l.b16 %v1070
    %v1087 = vunpack.c.l.b16 %v1071
    %v1088 = vunpack.c.l.b16 %v1072
    %v1089 = vunpack.c.l.b16 %v1073
    %v1090 = vpack.c.b16 %v1083, %v1082
    %v1091 = vpack.c.b16 %v1085, %v1084
    %v1092 = vpack.c.b16 %v1087, %v1086
    %v1093 = vpack.c.b16 %v1089, %v1088
    %vm1098 = vcmask 523264
    %v1100 = vsel %vm1098, %v1065, 0
    %1102 = vmatprep.subr.bf16.mxu0 0
    %1103 = vmatpush1.bf16.msra.mxu0 %v1090
    %1104 = vmatprep.subr.bf16.mxu0 0
    %1105 = vmatpush1.bf16.msra.mxu0 %v1091
    %1106 = vmatprep.subr.bf16.mxu0 0
    %1107 = vmatpush1.bf16.msra.mxu0 %v1092
    %1108 = vmatprep.subr.bf16.mxu0 0
    %1109 = vmatpush1.bf16.msra.mxu0 %v1093
    %1110 = vmatprep.subr.bf16.mxu0 0
    %1111 = vmatpush1.bf16.msra.mxu0 0
    %1112 = vmatprep.subr.bf16.mxu0 0
    %1113 = vmatpush1.bf16.msra.mxu0 0
    %1114 = vmatprep.subr.bf16.mxu0 0
    %1115 = vmatpush1.bf16.msra.mxu0 0
    %1116 = vmatprep.subr.bf16.mxu0 0
    %1117 = vmatpush1.bf16.msra.mxu0 0
    %1118 = vmatprep.subr.bf16.mxu0 0
    %1119 = vmatpush1.bf16.msra.mxu0 0
    %1120 = vmatprep.subr.bf16.mxu0 0
    %1121 = vmatpush1.bf16.msra.mxu0 0
    %1122 = vmatprep.subr.bf16.mxu0 0
    %1123 = vmatpush1.bf16.msra.mxu0 0
    %1124 = vmatprep.subr.bf16.mxu0 0
    %1125 = vmatpush1.bf16.msra.mxu0 0
    %1126 = vmatprep.subr.bf16.mxu0 0
    %1127 = vmatpush1.bf16.msra.mxu0 0
    %1128 = vmatprep.subr.bf16.mxu0 0
    %1129 = vmatpush1.bf16.msra.mxu0 0
    %1130 = vmatprep.subr.bf16.mxu0 0
    %1131 = vmatpush1.bf16.msra.mxu0 0
    %1132 = vmatprep.subr.bf16.mxu0 0
    %1133 = vmatpush1.bf16.msra.mxu0 0
    %1134 = vmatprep.mubr.bf16.mxu0 0
    %1135 = vmatmul.mubr.bf16.gmra.mrb[0].mxu0 %v1100
    %v1136 = vpop.f32.mrb[0].mxu0
    %v1137 = vadd.f32 0.0, %v1136
    %v1138 = vpop.f32.mrb[0].mxu0
    %v1139 = vpop.f32.mrb[0].mxu0
    %v1140 = vpop.f32.mrb[0].mxu0
    %1141 = vdwg.mxu0
    // Predicated region
    $region42: #{tpu_custom_call.1} parent=1 // pred_check
      %p1142 = pneg %p34
    $region43: #{tpu_custom_call.1} parent=1 // pred_check_branch
      %1144 = sbr.rel (%p1142) target = $region45
    $region44: #{tpu_custom_call.1} parent=1 // pred_region
      %1145 = vst.msk [vmem:[#allocation3] sm:$0xff] %vm1098, 0.0
    $region45: #{tpu_custom_call.1} parent=1 // pred_fallthru
      _
    %v1146 = vld [vmem:[#allocation3] sm:$0xff]
    %v1147 = vadd.f32 %v1146, %v1137
    %1148 = vst.msk [vmem:[#allocation3] sm:$0xff] %vm1098, %v1147
    // Predicated region
    $region46: #{tpu_custom_call.1} parent=1 // pred_check
      %p1149 = pneg %p34
    $region47: #{tpu_custom_call.1} parent=1 // pred_check_branch
      %1151 = sbr.rel (%p1149) target = $region49
    $region48: #{tpu_custom_call.1} parent=1 // pred_region
      %v1152 = vld [vmem:[#allocation3] sm:$0xff]
      %v1153 = vld [vmem:[%s8] sm:$0x1]
      %v1155 = vlaneseq
      %v1156 = vshrl.u32 %v1155, 7
      %v1157 = vsub.s32 0, %v1156
      %v1158 = vrot.slane %v1153, %v1157
      %v1160 = vadd.f32 %v1152, %v1158
      %1161 = vst.msk [vmem:[#allocation3] sm:$0xff] %vm1098, %v1160
    $region49: #{tpu_custom_call.1} parent=1 // pred_fallthru
      _
    // Predicated region
    $region50: #{tpu_custom_call.1} parent=1 // pred_check
      _
    $region51: #{tpu_custom_call.1} parent=1 // pred_check_branch
      %1163 = sbr.rel (0) target = $region53
    $region52: #{tpu_custom_call.1} parent=1 // pred_region
      %s1165 = ssub.s32 128, 128
      %1166 = vsyncadd [#allocation4], %s1165
      %s1168 = sshll.u32 [#allocation3], 4
      %s1169 = int_to_ptr.vmem [resolvable:$true] %s1168
      %1171 = dma.vmem_to_hbm [thread:$0]  %s1169, 128, %s9, [#allocation4]
    $region53: #{tpu_custom_call.1} parent=1 // pred_fallthru
      _
    // Predicated region
    $region54: #{tpu_custom_call.1} parent=1 // pred_check
      _
    $region55: #{tpu_custom_call.1} parent=1 // pred_check_branch
      %1173 = sbr.rel (0) target = $region57
    $region56: #{tpu_custom_call.1} parent=1 // pred_region
      %1174 = dma.done [#allocation4], 128
    $region57: #{tpu_custom_call.1} parent=1 // pred_fallthru
      _
    %1175 = vsyncpa [#allocation4], 1

</llo_original>
